<compile_context>
chip_gen: v7x
topology: tpu7x:2x2x1
jax: 0.10.0
libtpu: 0.0.40
codegen_flags: <defaults>
</compile_context>

<pallas_src>
import functools

import jax
import jax.numpy as jnp
from jax.experimental import pallas as pl
from jax.experimental.pallas import tpu as pltpu


_PRECISION = jax.lax.Precision.HIGHEST   # fp32 MXU passes; MXU slack makes this free.


def _round_up(n, m):
    return ((n + m - 1) // m) * m


def mlp_kernel(x_ref,
               w1_ref, b1_ref,
               w2_ref, b2_ref,
               w3_ref, b3_ref,
               w4_ref, b4_ref,
               o_ref):
    """Feature-major fused MLP.  x_ref: [9, TB]; W: [out, in]; b: [out, 1]."""
    def layer(w_ref, b_ref, h):
        return jnp.maximum(
            jnp.dot(w_ref[...], h,
                    preferred_element_type=jnp.float32,
                    precision=_PRECISION) + b_ref[...],
            0.0)

    h = x_ref[...]                 # [9,  TB]
    h = layer(w1_ref, b1_ref, h)   # [10, TB]
    h = layer(w2_ref, b2_ref, h)   # [20, TB]
    h = layer(w3_ref, b3_ref, h)   # [10, TB]
    h = layer(w4_ref, b4_ref, h)   # [9,  TB]  (ReLU on the last layer per spec)
    o_ref[...] = h.astype(o_ref.dtype)        # feature-major store: lane-dense


def _choose_tb(batch, tb_max):
    """Batch tile: a multiple of 128, as large as tb_max allows, but capped so
    a large batch still produces >= 8 grid blocks (v7x megacore + pipelining)."""
    tb = min(tb_max, _round_up(max(batch, 1), 128))
    cap = max(128, _round_up(pl.cdiv(max(batch, 1), 8), 128))
    return max(128, min(tb, cap))


def _vmem_limit_bytes(tb):
    """VMEM budget: 2x double-buffered in + out blocks plus the
    compiler-materialized inter-layer activations, all tile-padded to (8,128),
    plus headroom for weights / internal scratch.  Clamped to [32, 64] MiB so
    the request is valid on every generation (v7x physical VMEM is 64 MiB)."""
    def slab(rows):                                  # f32 [rows, tb], tile-padded
        return _round_up(rows, 8) * tb * 4
    est = 2 * slab(9) + 2 * slab(9)                  # in + out, double-buffered
    est += slab(10) + slab(20) + slab(10)            # inter-layer activations
    est += 4 << 20                                   # weights + scratch headroom
    return int(min(64 << 20, max(32 << 20, est)))


def _forward_fm(x_fm, params, tb):
    """Core path.  x_fm: [9, B] feature-major f32.  Returns [9, B]."""
    F, B = x_fm.shape
    assert F == 9, f"expected 9 input features, got {F}"
    w1, b1 = params["fc1"]
    w2, b2 = params["fc2"]
    w3, b3 = params["fc3"]
    w4, b4 = params["fc4"]

    TB = _choose_tb(B, tb)
    num_blocks = pl.cdiv(B, TB)     # ragged last block handled by Pallas (no pad)

    # Weights/biases: full-array, VMEM-resident blocks (constant index_map).
    resident = lambda a: pl.BlockSpec(a.shape, lambda i: (0,) * a.ndim)

    return pl.pallas_call(
        mlp_kernel,
        out_shape=jax.ShapeDtypeStruct((9, B), jnp.float32),
        grid=(num_blocks,),
        in_specs=[
            pl.BlockSpec((9, TB), lambda i: (0, i)),     # activations, tiled on B
            resident(w1), resident(b1),
            resident(w2), resident(b2),
            resident(w3), resident(b3),
            resident(w4), resident(b4),
        ],
        out_specs=pl.BlockSpec((9, TB), lambda i: (0, i)),
        compiler_params=pltpu.CompilerParams(
            dimension_semantics=("parallel",),           # megacore shard on v7x
            vmem_limit_bytes=_vmem_limit_bytes(TB),
        ),
    )(x_fm, w1, b1, w2, b2, w3, b3, w4, b4)


@functools.partial(jax.jit, static_argnames=("tb",))
def net_forward_fm(x_fm, params, tb=32768):
    """Throughput API: feature-major [9, B] in / [9, B] out — zero wrapper copies."""
    return _forward_fm(x_fm, params, tb)


@functools.partial(jax.jit, static_argnames=("tb",))
def net_forward(x, params, tb=32768):
    """PyTorch-layout API: [B, 9] in / [B, 9] out.
    Pays exactly one transpose on each side (layout plumbing only); use
    net_forward_fm for large-batch, throughput-critical callers."""
    return _forward_fm(x.T, params, tb).T


def init_params(key):
    """nn.Linear-style init: U(-1/sqrt(fan_in), 1/sqrt(fan_in)); W as [out, in]."""
    sizes = [("fc1", 9, 10), ("fc2", 10, 20), ("fc3", 20, 10), ("fc4", 10, 9)]
    params = {}
    for name, fin, fout in sizes:
        key, kw, kb = jax.random.split(key, 3)
        bound = 1.0 / (fin ** 0.5)
        W = jax.random.uniform(kw, (fout, fin), jnp.float32, -bound, bound)
        b = jax.random.uniform(kb, (fout, 1), jnp.float32, -bound, bound)
        params[name] = (W, b)
    return params


if __name__ == "__main__":
    key = jax.random.PRNGKey(0)
    kx, kp = jax.random.split(key)

    # B = 200 = 128 + 72: exercises the ragged-last-block path with no
    # wrapper-side padding (2 grid steps with the clamped TB=128 tile).
    B = 200
    x = jax.random.normal(kx, (B, 9), jnp.float32)
    params = init_params(kp)

    y = jax.block_until_ready(net_forward(x, params))
    assert y.shape == (B, 9)
    assert bool(jnp.all(y >= 0.0))        # ReLU on every layer, incl. the last

    # Zero-copy feature-major entry point must agree.
    y_fm = jax.block_until_ready(net_forward_fm(x.T, params))
    assert y_fm.shape == (9, B)

    # Reference in plain JAX (PyTorch semantics: y = relu(x @ W.T + b)) at the
    # same fp32 matmul precision as the kernel.
    ref = x
    for name in ["fc1", "fc2", "fc3", "fc4"]:
        W, b = params[name]
        ref = jnp.maximum(
            jnp.dot(ref, W.T, precision=_PRECISION) + b.reshape(1, -1), 0.0)

    assert bool(jnp.allclose(y, ref, atol=1e-5, rtol=1e-5))
    assert bool(jnp.allclose(y_fm.T, ref, atol=1e-5, rtol=1e-5))

    print("KERNEL_OK")
</pallas_src>

<mosaic_0001>
module attributes {stable_mosaic.version = 11 : i64} {
  func.func @mlp_kernel(%arg0: i32, %arg1: memref<9x128xf32, #tpu.memory_space<vmem>>, %arg2: memref<10x9xf32, #tpu.memory_space<vmem>>, %arg3: memref<10x1xf32, #tpu.memory_space<vmem>>, %arg4: memref<20x10xf32, #tpu.memory_space<vmem>>, %arg5: memref<20x1xf32, #tpu.memory_space<vmem>>, %arg6: memref<10x20xf32, #tpu.memory_space<vmem>>, %arg7: memref<10x1xf32, #tpu.memory_space<vmem>>, %arg8: memref<9x10xf32, #tpu.memory_space<vmem>>, %arg9: memref<9x1xf32, #tpu.memory_space<vmem>>, %arg10: memref<9x128xf32, #tpu.memory_space<vmem>>) attributes {dimension_semantics = [#tpu.dimension_semantics<parallel>], iteration_bounds = array<i64: 2>, scalar_prefetch = 0 : i64, scratch_operands = 0 : i64, tpu.core_type = #tpu.core_type<tc>, window_params = [{transform_indices = @transform_0, window_bounds = array<i64: 9, 128>}, {pipeline_mode = #tpu.pipeline_mode<synchronous>, transform_indices = @transform_1, window_bounds = array<i64: 10, 9>}, {pipeline_mode = #tpu.pipeline_mode<synchronous>, transform_indices = @transform_2, window_bounds = array<i64: 10, 1>}, {pipeline_mode = #tpu.pipeline_mode<synchronous>, transform_indices = @transform_3, window_bounds = array<i64: 20, 10>}, {pipeline_mode = #tpu.pipeline_mode<synchronous>, transform_indices = @transform_4, window_bounds = array<i64: 20, 1>}, {pipeline_mode = #tpu.pipeline_mode<synchronous>, transform_indices = @transform_5, window_bounds = array<i64: 10, 20>}, {pipeline_mode = #tpu.pipeline_mode<synchronous>, transform_indices = @transform_6, window_bounds = array<i64: 10, 1>}, {pipeline_mode = #tpu.pipeline_mode<synchronous>, transform_indices = @transform_7, window_bounds = array<i64: 9, 10>}, {pipeline_mode = #tpu.pipeline_mode<synchronous>, transform_indices = @transform_8, window_bounds = array<i64: 9, 1>}, {transform_indices = @transform_9, window_bounds = array<i64: 9, 128>}]} {
    %c0 = arith.constant 0 : index
    %c0_0 = arith.constant 0 : index
    %0 = vector.load %arg1[%c0, %c0_0] : memref<9x128xf32, #tpu.memory_space<vmem>>, vector<9x128xf32>
    %c0_1 = arith.constant 0 : index
    %c0_2 = arith.constant 0 : index
    %1 = vector.load %arg2[%c0_1, %c0_2] : memref<10x9xf32, #tpu.memory_space<vmem>>, vector<10x9xf32>
    %cst = arith.constant dense<0.000000e+00> : vector<10x128xf32>
    %2 = tpu.matmul %1, %0, %cst {dimension_numbers = #tpu.dot_dimension_numbers<[1], [0], [0], [1], [0, 0, 1, 1], [], []>, precision = #tpu.contract_precision<fp32>} : vector<10x9xf32>, vector<9x128xf32>, vector<10x128xf32> -> vector<10x128xf32>
    %c0_3 = arith.constant 0 : index
    %c0_4 = arith.constant 0 : index
    %3 = vector.load %arg3[%c0_3, %c0_4] : memref<10x1xf32, #tpu.memory_space<vmem>>, vector<10x1xf32>
    %4 = vector.broadcast %3 : vector<10x1xf32> to vector<10x128xf32>
    %5 = arith.addf %2, %4 : vector<10x128xf32>
    %cst_5 = arith.constant 0.000000e+00 : f32
    %6 = vector.broadcast %cst_5 : f32 to vector<10x128xf32>
    %7 = arith.maximumf %5, %6 : vector<10x128xf32>
    %c0_6 = arith.constant 0 : index
    %c0_7 = arith.constant 0 : index
    %8 = vector.load %arg4[%c0_6, %c0_7] : memref<20x10xf32, #tpu.memory_space<vmem>>, vector<20x10xf32>
    %cst_8 = arith.constant dense<0.000000e+00> : vector<20x128xf32>
    %9 = tpu.matmul %8, %7, %cst_8 {dimension_numbers = #tpu.dot_dimension_numbers<[1], [0], [0], [1], [0, 0, 1, 1], [], []>, precision = #tpu.contract_precision<fp32>} : vector<20x10xf32>, vector<10x128xf32>, vector<20x128xf32> -> vector<20x128xf32>
    %c0_9 = arith.constant 0 : index
    %c0_10 = arith.constant 0 : index
    %10 = vector.load %arg5[%c0_9, %c0_10] : memref<20x1xf32, #tpu.memory_space<vmem>>, vector<20x1xf32>
    %11 = vector.broadcast %10 : vector<20x1xf32> to vector<20x128xf32>
    %12 = arith.addf %9, %11 : vector<20x128xf32>
    %cst_11 = arith.constant 0.000000e+00 : f32
    %13 = vector.broadcast %cst_11 : f32 to vector<20x128xf32>
    %14 = arith.maximumf %12, %13 : vector<20x128xf32>
    %c0_12 = arith.constant 0 : index
    %c0_13 = arith.constant 0 : index
    %15 = vector.load %arg6[%c0_12, %c0_13] : memref<10x20xf32, #tpu.memory_space<vmem>>, vector<10x20xf32>
    %cst_14 = arith.constant dense<0.000000e+00> : vector<10x128xf32>
    %16 = tpu.matmul %15, %14, %cst_14 {dimension_numbers = #tpu.dot_dimension_numbers<[1], [0], [0], [1], [0, 0, 1, 1], [], []>, precision = #tpu.contract_precision<fp32>} : vector<10x20xf32>, vector<20x128xf32>, vector<10x128xf32> -> vector<10x128xf32>
    %c0_15 = arith.constant 0 : index
    %c0_16 = arith.constant 0 : index
    %17 = vector.load %arg7[%c0_15, %c0_16] : memref<10x1xf32, #tpu.memory_space<vmem>>, vector<10x1xf32>
    %18 = vector.broadcast %17 : vector<10x1xf32> to vector<10x128xf32>
    %19 = arith.addf %16, %18 : vector<10x128xf32>
    %cst_17 = arith.constant 0.000000e+00 : f32
    %20 = vector.broadcast %cst_17 : f32 to vector<10x128xf32>
    %21 = arith.maximumf %19, %20 : vector<10x128xf32>
    %c0_18 = arith.constant 0 : index
    %c0_19 = arith.constant 0 : index
    %22 = vector.load %arg8[%c0_18, %c0_19] : memref<9x10xf32, #tpu.memory_space<vmem>>, vector<9x10xf32>
    %cst_20 = arith.constant dense<0.000000e+00> : vector<9x128xf32>
    %23 = tpu.matmul %22, %21, %cst_20 {dimension_numbers = #tpu.dot_dimension_numbers<[1], [0], [0], [1], [0, 0, 1, 1], [], []>, precision = #tpu.contract_precision<fp32>} : vector<9x10xf32>, vector<10x128xf32>, vector<9x128xf32> -> vector<9x128xf32>
    %c0_21 = arith.constant 0 : index
    %c0_22 = arith.constant 0 : index
    %24 = vector.load %arg9[%c0_21, %c0_22] : memref<9x1xf32, #tpu.memory_space<vmem>>, vector<9x1xf32>
    %25 = vector.broadcast %24 : vector<9x1xf32> to vector<9x128xf32>
    %26 = arith.addf %23, %25 : vector<9x128xf32>
    %cst_23 = arith.constant 0.000000e+00 : f32
    %27 = vector.broadcast %cst_23 : f32 to vector<9x128xf32>
    %28 = arith.maximumf %26, %27 : vector<9x128xf32>
    %c0_24 = arith.constant 0 : index
    %c0_25 = arith.constant 0 : index
    %29 = vector.load %arg10[%c0_24, %c0_25] : memref<9x128xf32, #tpu.memory_space<vmem>>, vector<9x128xf32>
    tpu.vector_store %arg10[%c0_24, %c0_25], %28 {strides = array<i32>} : memref<9x128xf32, #tpu.memory_space<vmem>>, vector<9x128xf32>,
    return
  }
  func.func @transform_0(%arg0: i32) -> (i32, i32) {
    %c0_i32 = arith.constant 0 : i32
    %c0_i32_0 = arith.constant 0 : i32
    return %c0_i32, %arg0 : i32, i32
  }
  func.func @transform_1(%arg0: i32) -> (i32, i32) {
    %c0_i32 = arith.constant 0 : i32
    %c0_i32_0 = arith.constant 0 : i32
    %c0_i32_1 = arith.constant 0 : i32
    return %c0_i32, %c0_i32_0 : i32, i32
  }
  func.func @transform_2(%arg0: i32) -> (i32, i32) {
    %c0_i32 = arith.constant 0 : i32
    %c0_i32_0 = arith.constant 0 : i32
    %c0_i32_1 = arith.constant 0 : i32
    return %c0_i32, %c0_i32_0 : i32, i32
  }
  func.func @transform_3(%arg0: i32) -> (i32, i32) {
    %c0_i32 = arith.constant 0 : i32
    %c0_i32_0 = arith.constant 0 : i32
    %c0_i32_1 = arith.constant 0 : i32
    return %c0_i32, %c0_i32_0 : i32, i32
  }
  func.func @transform_4(%arg0: i32) -> (i32, i32) {
    %c0_i32 = arith.constant 0 : i32
    %c0_i32_0 = arith.constant 0 : i32
    %c0_i32_1 = arith.constant 0 : i32
    return %c0_i32, %c0_i32_0 : i32, i32
  }
  func.func @transform_5(%arg0: i32) -> (i32, i32) {
    %c0_i32 = arith.constant 0 : i32
    %c0_i32_0 = arith.constant 0 : i32
    %c0_i32_1 = arith.constant 0 : i32
    return %c0_i32, %c0_i32_0 : i32, i32
  }
  func.func @transform_6(%arg0: i32) -> (i32, i32) {
    %c0_i32 = arith.constant 0 : i32
    %c0_i32_0 = arith.constant 0 : i32
    %c0_i32_1 = arith.constant 0 : i32
    return %c0_i32, %c0_i32_0 : i32, i32
  }
  func.func @transform_7(%arg0: i32) -> (i32, i32) {
    %c0_i32 = arith.constant 0 : i32
    %c0_i32_0 = arith.constant 0 : i32
    %c0_i32_1 = arith.constant 0 : i32
    return %c0_i32, %c0_i32_0 : i32, i32
  }
  func.func @transform_8(%arg0: i32) -> (i32, i32) {
    %c0_i32 = arith.constant 0 : i32
    %c0_i32_0 = arith.constant 0 : i32
    %c0_i32_1 = arith.constant 0 : i32
    return %c0_i32, %c0_i32_0 : i32, i32
  }
  func.func @transform_9(%arg0: i32) -> (i32, i32) {
    %c0_i32 = arith.constant 0 : i32
    %c0_i32_0 = arith.constant 0 : i32
    return %c0_i32, %arg0 : i32, i32
  }
}

</mosaic_0001>

<llo_original>
// kernel: net_forward.1
$region0: #{net_forward.1}
  #allocation0 [shape = 'u32[]', space=smem, size = 0x4, offset = 0x4, fixed_abs, tag = 'smem constant byte address 0x4 - core index']
  #allocation1 [shape = 'u32[144,128]{1,0:T(1,128)}', space=vmem, size = 0x12000, scoped, tag = 'internal scratch']
  %s0 = inlined_call_operand.vmem [shape: f32[9,200], index: 0, kind: input, shape index: {}]
  %s1 = inlined_call_operand.vmem [shape: f32[10,9], index: 1, kind: input, shape index: {}]
  %s2 = inlined_call_operand.vmem [shape: f32[10,1], index: 2, kind: input, shape index: {}]
  %s3 = inlined_call_operand.vmem [shape: f32[20,10], index: 3, kind: input, shape index: {}]
  %s4 = inlined_call_operand.vmem [shape: f32[20,1], index: 4, kind: input, shape index: {}]
  %s5 = inlined_call_operand.vmem [shape: f32[10,20], index: 5, kind: input, shape index: {}]
  %s6 = inlined_call_operand.vmem [shape: f32[10,1], index: 6, kind: input, shape index: {}]
  %s7 = inlined_call_operand.vmem [shape: f32[9,10], index: 7, kind: input, shape index: {}]
  %s8 = inlined_call_operand.vmem [shape: f32[9,1], index: 8, kind: input, shape index: {}]
  %s9 = inlined_call_operand.hbm [shape: f32[9,200], index: 9, kind: output, shape index: {}]
  %s10 = sld [smem:[#allocation0]]
  $region107: #{net_forward.1} parent=0
    _
  %s12 = ssub.s32 1, %s10
  %s13 = scalar_select 0, %s12, %s10
  $region1: #{net_forward.1} parent=0
    #allocation2 [shape = 'u8[16384]{0}', space=vmem, size = 0x4000, scoped, tag = 'input window, operand 0']
    #allocation3 [shape = 'u8[16384]{0}', space=vmem, size = 0x4000, scoped, tag = 'output window, operand 0']
    #allocation4 [shape = 's32[2]{0}', space=sflag, size = 0x8, scoped, tag = 'scoped memory for net_forward.1']
    %14 = vsyncpa [#allocation4], 0
    %s15 = scalar_lea.sflag [#allocation4], 1
    %16 = vsyncpa %s15, 0
    loop: start=0, step=1, limit=4
    $region2: #{net_forward.1} parent=1 // loop_pre_header
      _
    $region3: #{net_forward.1} parent=1 // loop_header
      %s18 = sphi 0, %s22
      %p19 = scmp.ge.s32.totalorder %s18, 4
      %s28 = sphi 0, %s30
      %s31 = sphi 0, %s28
      %s32 = sphi 0, %s31
      %s48 = sphi 0, %s32
      %s52 = sphi 0, %s52
      %s54 = sphi 0, %s52
      %s55 = sphi 0, %s54
      %s69 = sphi 0, %s55
      %s73 = sphi 0, %s73
      %s75 = sphi 0, %s73
      %s76 = sphi 0, %s75
      %s90 = sphi 0, %s76
      %s94 = sphi 0, %s94
      %s96 = sphi 0, %s94
      %s97 = sphi 0, %s96
      %s111 = sphi 0, %s97
      %s115 = sphi 0, %s115
      %s117 = sphi 0, %s115
      %s118 = sphi 0, %s117
      %s132 = sphi 0, %s118
      %s136 = sphi 0, %s136
      %s138 = sphi 0, %s136
      %s139 = sphi 0, %s138
      %s153 = sphi 0, %s139
      %s157 = sphi 0, %s157
      %s159 = sphi 0, %s157
      %s160 = sphi 0, %s159
      %s174 = sphi 0, %s160
      %s178 = sphi 0, %s178
      %s180 = sphi 0, %s178
      %s181 = sphi 0, %s180
      %s195 = sphi 0, %s181
      %s199 = sphi 0, %s199
      %s201 = sphi 0, %s199
      %s202 = sphi 0, %s201
      %s216 = sphi 0, %s202
      %s222 = sphi 0, %s224
      %s225 = sphi 0, %s222
      %s226 = sphi 0, %s225
      %s242 = sphi 0, %s226
    $region4: #{net_forward.1} parent=1 // loop_header_branch
      %21 = sbr.rel (%p19) target = $region8
    $region5: #{net_forward.1} parent=1 // loop_body
      %s23 = ssub.s32 %s18, 1
      %s24 = ssub.s32 %s18, 2
      %s25 = sadd.s32 %s18, 1
      %s26 = ssub.s32 %s18, %s25
      %p27 = scmp.eq.s32.totalorder %s26, 0
      %s29 = sadd.s32 %s28, 1
      %s30 = scalar_select %p27, %s28, %s29
      %p33 = pneg %p27
      %p34 = scmp.eq.s32.totalorder %s18, 1
      %p35 = por %p33, %p34
      %p36 = scmp.ne.s32.totalorder %s28, %s31
      %p37 = scmp.eq.s32.totalorder %s18, 0
      %p38 = por %p36, %p37
      %p39 = scmp.ne.s32.totalorder %s28, %s31
      %p40 = scmp.eq.s32.totalorder %s23, 1
      %p41 = por %p39, %p40
      %p42 = scmp.ne.s32.totalorder %s31, %s32
      %p43 = scmp.eq.s32.totalorder %s23, 0
      %p44 = por %p42, %p43
      %p45 = scmp.ne.s32.totalorder %s31, %s32
      %p46 = scmp.eq.s32.totalorder %s24, 1
      %p47 = por %p45, %p46
      %p49 = scmp.ne.s32.totalorder %s32, %s48
      %p50 = scmp.eq.s32.totalorder %s24, 0
      %p51 = por %p49, %p50
      %s53 = sadd.s32 %s52, 1
      %p56 = scmp.eq.s32.totalorder %s18, 1
      %p57 = scmp.ne.s32.totalorder %s52, %s54
      %p58 = scmp.eq.s32.totalorder %s18, 0
      %p59 = por %p57, %p58
      %p60 = scmp.ne.s32.totalorder %s52, %s54
      %p61 = scmp.eq.s32.totalorder %s23, 1
      %p62 = por %p60, %p61
      %p63 = scmp.ne.s32.totalorder %s54, %s55
      %p64 = scmp.eq.s32.totalorder %s23, 0
      %p65 = por %p63, %p64
      %p66 = scmp.ne.s32.totalorder %s54, %s55
      %p67 = scmp.eq.s32.totalorder %s24, 1
      %p68 = por %p66, %p67
      %p70 = scmp.ne.s32.totalorder %s55, %s69
      %p71 = scmp.eq.s32.totalorder %s24, 0
      %p72 = por %p70, %p71
      %s74 = sadd.s32 %s73, 1
      %p77 = scmp.eq.s32.totalorder %s18, 1
      %p78 = scmp.ne.s32.totalorder %s73, %s75
      %p79 = scmp.eq.s32.totalorder %s18, 0
      %p80 = por %p78, %p79
      %p81 = scmp.ne.s32.totalorder %s73, %s75
      %p82 = scmp.eq.s32.totalorder %s23, 1
      %p83 = por %p81, %p82
      %p84 = scmp.ne.s32.totalorder %s75, %s76
      %p85 = scmp.eq.s32.totalorder %s23, 0
      %p86 = por %p84, %p85
      %p87 = scmp.ne.s32.totalorder %s75, %s76
      %p88 = scmp.eq.s32.totalorder %s24, 1
      %p89 = por %p87, %p88
      %p91 = scmp.ne.s32.totalorder %s76, %s90
      %p92 = scmp.eq.s32.totalorder %s24, 0
      %p93 = por %p91, %p92
      %s95 = sadd.s32 %s94, 1
      %p98 = scmp.eq.s32.totalorder %s18, 1
      %p99 = scmp.ne.s32.totalorder %s94, %s96
      %p100 = scmp.eq.s32.totalorder %s18, 0
      %p101 = por %p99, %p100
      %p102 = scmp.ne.s32.totalorder %s94, %s96
      %p103 = scmp.eq.s32.totalorder %s23, 1
      %p104 = por %p102, %p103
      %p105 = scmp.ne.s32.totalorder %s96, %s97
      %p106 = scmp.eq.s32.totalorder %s23, 0
      %p107 = por %p105, %p106
      %p108 = scmp.ne.s32.totalorder %s96, %s97
      %p109 = scmp.eq.s32.totalorder %s24, 1
      %p110 = por %p108, %p109
      %p112 = scmp.ne.s32.totalorder %s97, %s111
      %p113 = scmp.eq.s32.totalorder %s24, 0
      %p114 = por %p112, %p113
      %s116 = sadd.s32 %s115, 1
      %p119 = scmp.eq.s32.totalorder %s18, 1
      %p120 = scmp.ne.s32.totalorder %s115, %s117
      %p121 = scmp.eq.s32.totalorder %s18, 0
      %p122 = por %p120, %p121
      %p123 = scmp.ne.s32.totalorder %s115, %s117
      %p124 = scmp.eq.s32.totalorder %s23, 1
      %p125 = por %p123, %p124
      %p126 = scmp.ne.s32.totalorder %s117, %s118
      %p127 = scmp.eq.s32.totalorder %s23, 0
      %p128 = por %p126, %p127
      %p129 = scmp.ne.s32.totalorder %s117, %s118
      %p130 = scmp.eq.s32.totalorder %s24, 1
      %p131 = por %p129, %p130
      %p133 = scmp.ne.s32.totalorder %s118, %s132
      %p134 = scmp.eq.s32.totalorder %s24, 0
      %p135 = por %p133, %p134
      %s137 = sadd.s32 %s136, 1
      %p140 = scmp.eq.s32.totalorder %s18, 1
      %p141 = scmp.ne.s32.totalorder %s136, %s138
      %p142 = scmp.eq.s32.totalorder %s18, 0
      %p143 = por %p141, %p142
      %p144 = scmp.ne.s32.totalorder %s136, %s138
      %p145 = scmp.eq.s32.totalorder %s23, 1
      %p146 = por %p144, %p145
      %p147 = scmp.ne.s32.totalorder %s138, %s139
      %p148 = scmp.eq.s32.totalorder %s23, 0
      %p149 = por %p147, %p148
      %p150 = scmp.ne.s32.totalorder %s138, %s139
      %p151 = scmp.eq.s32.totalorder %s24, 1
      %p152 = por %p150, %p151
      %p154 = scmp.ne.s32.totalorder %s139, %s153
      %p155 = scmp.eq.s32.totalorder %s24, 0
      %p156 = por %p154, %p155
      %s158 = sadd.s32 %s157, 1
      %p161 = scmp.eq.s32.totalorder %s18, 1
      %p162 = scmp.ne.s32.totalorder %s157, %s159
      %p163 = scmp.eq.s32.totalorder %s18, 0
      %p164 = por %p162, %p163
      %p165 = scmp.ne.s32.totalorder %s157, %s159
      %p166 = scmp.eq.s32.totalorder %s23, 1
      %p167 = por %p165, %p166
      %p168 = scmp.ne.s32.totalorder %s159, %s160
      %p169 = scmp.eq.s32.totalorder %s23, 0
      %p170 = por %p168, %p169
      %p171 = scmp.ne.s32.totalorder %s159, %s160
      %p172 = scmp.eq.s32.totalorder %s24, 1
      %p173 = por %p171, %p172
      %p175 = scmp.ne.s32.totalorder %s160, %s174
      %p176 = scmp.eq.s32.totalorder %s24, 0
      %p177 = por %p175, %p176
      %s179 = sadd.s32 %s178, 1
      %p182 = scmp.eq.s32.totalorder %s18, 1
      %p183 = scmp.ne.s32.totalorder %s178, %s180
      %p184 = scmp.eq.s32.totalorder %s18, 0
      %p185 = por %p183, %p184
      %p186 = scmp.ne.s32.totalorder %s178, %s180
      %p187 = scmp.eq.s32.totalorder %s23, 1
      %p188 = por %p186, %p187
      %p189 = scmp.ne.s32.totalorder %s180, %s181
      %p190 = scmp.eq.s32.totalorder %s23, 0
      %p191 = por %p189, %p190
      %p192 = scmp.ne.s32.totalorder %s180, %s181
      %p193 = scmp.eq.s32.totalorder %s24, 1
      %p194 = por %p192, %p193
      %p196 = scmp.ne.s32.totalorder %s181, %s195
      %p197 = scmp.eq.s32.totalorder %s24, 0
      %p198 = por %p196, %p197
      %s200 = sadd.s32 %s199, 1
      %p203 = scmp.eq.s32.totalorder %s18, 1
      %p204 = scmp.ne.s32.totalorder %s199, %s201
      %p205 = scmp.eq.s32.totalorder %s18, 0
      %p206 = por %p204, %p205
      %p207 = scmp.ne.s32.totalorder %s199, %s201
      %p208 = scmp.eq.s32.totalorder %s23, 1
      %p209 = por %p207, %p208
      %p210 = scmp.ne.s32.totalorder %s201, %s202
      %p211 = scmp.eq.s32.totalorder %s23, 0
      %p212 = por %p210, %p211
      %p213 = scmp.ne.s32.totalorder %s201, %s202
      %p214 = scmp.eq.s32.totalorder %s24, 1
      %p215 = por %p213, %p214
      %p217 = scmp.ne.s32.totalorder %s202, %s216
      %p218 = scmp.eq.s32.totalorder %s24, 0
      %p219 = por %p217, %p218
      %s220 = ssub.s32 %s18, %s25
      %p221 = scmp.eq.s32.totalorder %s220, 0
      %s223 = sadd.s32 %s222, 1
      %s224 = scalar_select %p221, %s222, %s223
      %p227 = pneg %p221
      %p228 = scmp.eq.s32.totalorder %s18, 1
      %p229 = por %p227, %p228
      %p230 = scmp.ne.s32.totalorder %s222, %s225
      %p231 = scmp.eq.s32.totalorder %s18, 0
      %p232 = por %p230, %p231
      %p233 = scmp.ne.s32.totalorder %s222, %s225
      %p234 = scmp.eq.s32.totalorder %s23, 1
      %p235 = por %p233, %p234
      %p236 = scmp.ne.s32.totalorder %s225, %s226
      %p237 = scmp.eq.s32.totalorder %s23, 0
      %p238 = por %p236, %p237
      %p239 = scmp.ne.s32.totalorder %s225, %s226
      %p240 = scmp.eq.s32.totalorder %s24, 1
      %p241 = por %p239, %p240
      %p243 = scmp.ne.s32.totalorder %s226, %s242
      %p244 = scmp.eq.s32.totalorder %s24, 0
      %p245 = por %p243, %p244
      %p246 = scmp.le.s32.totalorder 1, %s18
      %p247 = scmp.lt.s32.totalorder %s18, 3
      %p248 = pnand %p246, %p247
      %p249 = pneg %p248
      // Predicated region
      $region9: #{net_forward.1} parent=5 // pred_check
        _
      $region10: #{net_forward.1} parent=5 // pred_check_branch
        %251 = sbr.rel (%p248) target = $region12
      $region11: #{net_forward.1} parent=5 // pred_region
        %s252 = ssub.s32 %s18, 1
        // Predicated region
        $region13: #{net_forward.1} parent=11 // pred_check
          %p253 = pneg %p65
        $region14: #{net_forward.1} parent=11 // pred_check_branch
          %255 = sbr.rel (%p253) target = $region16
        $region15: #{net_forward.1} parent=11 // pred_region
          _
        $region16: #{net_forward.1} parent=11 // pred_fallthru
          _
        // Predicated region
        $region17: #{net_forward.1} parent=11 // pred_check
          %p256 = pneg %p86
        $region18: #{net_forward.1} parent=11 // pred_check_branch
          %258 = sbr.rel (%p256) target = $region20
        $region19: #{net_forward.1} parent=11 // pred_region
          _
        $region20: #{net_forward.1} parent=11 // pred_fallthru
          _
        // Predicated region
        $region21: #{net_forward.1} parent=11 // pred_check
          %p259 = pneg %p107
        $region22: #{net_forward.1} parent=11 // pred_check_branch
          %261 = sbr.rel (%p259) target = $region24
        $region23: #{net_forward.1} parent=11 // pred_region
          _
        $region24: #{net_forward.1} parent=11 // pred_fallthru
          _
        // Predicated region
        $region25: #{net_forward.1} parent=11 // pred_check
          %p262 = pneg %p128
        $region26: #{net_forward.1} parent=11 // pred_check_branch
          %264 = sbr.rel (%p262) target = $region28
        $region27: #{net_forward.1} parent=11 // pred_region
          _
        $region28: #{net_forward.1} parent=11 // pred_fallthru
          _
        // Predicated region
        $region29: #{net_forward.1} parent=11 // pred_check
          %p265 = pneg %p149
        $region30: #{net_forward.1} parent=11 // pred_check_branch
          %267 = sbr.rel (%p265) target = $region32
        $region31: #{net_forward.1} parent=11 // pred_region
          _
        $region32: #{net_forward.1} parent=11 // pred_fallthru
          _
        // Predicated region
        $region33: #{net_forward.1} parent=11 // pred_check
          %p268 = pneg %p170
        $region34: #{net_forward.1} parent=11 // pred_check_branch
          %270 = sbr.rel (%p268) target = $region36
        $region35: #{net_forward.1} parent=11 // pred_region
          _
        $region36: #{net_forward.1} parent=11 // pred_fallthru
          _
        // Predicated region
        $region37: #{net_forward.1} parent=11 // pred_check
          %p271 = pneg %p191
        $region38: #{net_forward.1} parent=11 // pred_check_branch
          %273 = sbr.rel (%p271) target = $region40
        $region39: #{net_forward.1} parent=11 // pred_region
          _
        $region40: #{net_forward.1} parent=11 // pred_fallthru
          _
        // Predicated region
        $region41: #{net_forward.1} parent=11 // pred_check
          %p274 = pneg %p212
        $region42: #{net_forward.1} parent=11 // pred_check_branch
          %276 = sbr.rel (%p274) target = $region44
        $region43: #{net_forward.1} parent=11 // pred_region
          _
        $region44: #{net_forward.1} parent=11 // pred_fallthru
          _
      $region12: #{net_forward.1} parent=5 // pred_fallthru
        _
      %p277 = scmp.lt.s32.totalorder %s18, 2
      // Predicated region
      $region45: #{net_forward.1} parent=5 // pred_check
        %p278 = pneg %p277
      $region46: #{net_forward.1} parent=5 // pred_check_branch
        %280 = sbr.rel (%p278) target = $region48
      $region47: #{net_forward.1} parent=5 // pred_region
        // Predicated region
        $region49: #{net_forward.1} parent=47 // pred_check
          %p281 = pneg %p38
        $region50: #{net_forward.1} parent=47 // pred_check_branch
          %283 = sbr.rel (%p281) target = $region52
        $region51: #{net_forward.1} parent=47 // pred_region
          %s284 = sand.u32 %s28, 1
          %s285 = sand.u32 %s28, 1
          %s286 = smul.addr %s285, 16
          %s287 = scalar_lea.vmem [#allocation2], %s286
          %s288 = smul.addr %s18, 8
          %s289 = scalar_lea.vmem %s0, %s288
          // Predicated region
          $region53: #{net_forward.1} parent=51 // pred_check
            _
          $region54: #{net_forward.1} parent=51 // pred_check_branch
            %291 = sbr.rel (0) target = $region56
          $region55: #{net_forward.1} parent=51 // pred_region
            // Predicated region
            $region57: #{net_forward.1} parent=55 // pred_check
              _
            $region58: #{net_forward.1} parent=55 // pred_check_branch
              %293 = sbr.rel (0) target = $region60
            $region59: #{net_forward.1} parent=55 // pred_region
              // Predicated region
              $region72: #{net_forward.1} parent=59 // pred_check
                _
              $region73: #{net_forward.1} parent=59 // pred_check_branch
                %310 = sbr.rel (0) target = $region75
              $region74: #{net_forward.1} parent=59 // pred_region
                loop: start=0, step=1, limit=1
                $region76: #{net_forward.1} parent=74 // loop_pre_header
                  _
                $region77: #{net_forward.1} parent=74 // loop_header
                  %s312 = sphi 0, %s316
                  %p313 = scmp.ge.s32.totalorder %s312, 1
                  %s317 = sphi %s289, %s289
                  %s318 = sphi %s287, %s287
                $region78: #{net_forward.1} parent=74 // loop_header_branch
                  %315 = sbr.rel (%p313) target = $region82
                $region79: #{net_forward.1} parent=74 // loop_body
                  %v319 = vld [vmem:[%s317] sm:$0xff]
                  %320 = vst [vmem:[%s318] sm:$0xff] %v319
                  %v321 = vld [vmem:[%s317 + $0x10] sm:$0xff]
                  %322 = vst [vmem:[%s318 + $0x8] sm:$0xff] %v321
                $region80: #{net_forward.1} parent=74 // loop_footer
                  %s316 = sadd.s32 1, %s312
                $region81: #{net_forward.1} parent=74 // loop_footer_branch
                  %311 = sbr.rel target = $region77
                $region82: #{net_forward.1} parent=74 // loop_exit
                  _
              $region75: #{net_forward.1} parent=59 // pred_fallthru
                _
              // Predicated region
              $region83: #{net_forward.1} parent=59 // pred_check
                _
              $region84: #{net_forward.1} parent=59 // pred_check_branch
                %324 = sbr.rel target = $region86
              $region85: #{net_forward.1} parent=59 // pred_region
                _
              $region86: #{net_forward.1} parent=59 // pred_fallthru
                _
            $region60: #{net_forward.1} parent=55 // pred_fallthru
              _
            // Predicated region
            $region61: #{net_forward.1} parent=55 // pred_check
              _
            $region62: #{net_forward.1} parent=55 // pred_check_branch
              %295 = sbr.rel target = $region64
            $region63: #{net_forward.1} parent=55 // pred_region
              loop: start=0, step=1, limit=1
              $region65: #{net_forward.1} parent=63 // loop_pre_header
                _
              $region66: #{net_forward.1} parent=63 // loop_header
                %s298 = sphi 0, %s302
                %p299 = scmp.ge.s32.totalorder %s298, 1
                %s303 = sphi %s289, %s289
                %s304 = sphi %s287, %s287
              $region67: #{net_forward.1} parent=63 // loop_header_branch
                %301 = sbr.rel (%p299) target = $region71
              $region68: #{net_forward.1} parent=63 // loop_body
                %v305 = vld [vmem:[%s303] sm:$0xff]
                %306 = vst [vmem:[%s304] sm:$0xff] %v305
                %v307 = vld [vmem:[%s303 + $0x10] sm:$0xff]
                %308 = vst [vmem:[%s304 + $0x8] sm:$0xff] %v307
              $region69: #{net_forward.1} parent=63 // loop_footer
                %s302 = sadd.s32 1, %s298
              $region70: #{net_forward.1} parent=63 // loop_footer_branch
                %297 = sbr.rel target = $region66
              $region71: #{net_forward.1} parent=63 // loop_exit
                _
            $region64: #{net_forward.1} parent=55 // pred_fallthru
              _
          $region56: #{net_forward.1} parent=51 // pred_fallthru
            _
          %325 = vnop
        $region52: #{net_forward.1} parent=47 // pred_fallthru
          _
      $region48: #{net_forward.1} parent=5 // pred_fallthru
        _
      %p326 = scmp.le.s32.totalorder 1, %s18
      %p327 = scmp.lt.s32.totalorder %s18, 3
      %p328 = pnand %p326, %p327
      %p329 = pneg %p328
      // Predicated region
      $region87: #{net_forward.1} parent=5 // pred_check
        _
      $region88: #{net_forward.1} parent=5 // pred_check_branch
        %331 = sbr.rel (%p328) target = $region90
      $region89: #{net_forward.1} parent=5 // pred_region
        %s332 = ssub.s32 %s18, 1
        %s333 = sand.u32 %s31, 1
        %s334 = sand.u32 %s31, 1
        %s335 = smul.addr %s334, 16
        %s336 = scalar_lea.vmem [#allocation2], %s335
        // Predicated region
        $region91: #{net_forward.1} parent=89 // pred_check
          %p337 = pneg %p44
        $region92: #{net_forward.1} parent=89 // pred_check_branch
          %339 = sbr.rel (%p337) target = $region94
        $region93: #{net_forward.1} parent=89 // pred_region
          _
        $region94: #{net_forward.1} parent=89 // pred_fallthru
          _
        %s340 = sand.u32 %s31, 1
        %s341 = sand.u32 %s31, 1
        %s342 = smul.addr %s341, 16
        %s343 = scalar_lea.vmem [#allocation2], %s342
        %p344 = pneg %p44
        %p345 = pneg %p41
        %p346 = pneg %p65
        %p347 = pneg %p62
        %p348 = pneg %p86
        %p349 = pneg %p83
        %p350 = pneg %p107
        %p351 = pneg %p104
        %p352 = pneg %p128
        %p353 = pneg %p125
        %p354 = pneg %p149
        %p355 = pneg %p146
        %p356 = pneg %p170
        %p357 = pneg %p167
        %p358 = pneg %p191
        %p359 = pneg %p188
        %p360 = pneg %p212
        %p361 = pneg %p209
        %p362 = pneg %p238
        %p363 = pneg %p235
        %s364 = sand.u32 %s225, 1
        %s365 = scalar_lea.sflag [#allocation4], %s364
        %s366 = sand.u32 %s225, 1
        %s367 = smul.addr %s366, 16
        %s368 = scalar_lea.vmem [#allocation3], %s367
        %v369 = vld [vmem:[%s336] sm:$0xff]
        %v370 = vld [vmem:[%s336 + $0x8] sm:$0x1]
        %v371 = vld [vmem:[%s1] sm:$0xff]
        %v372 = vld [vmem:[%s1 + $0x8] sm:$0x3]
        %v373 = vld [vmem:[%s2] sm:$0xff]
        %v374 = vld [vmem:[%s2 + $0x8] sm:$0x3]
        %376 = vset.pattern.permute.xlu0 0
        %377 = vperm.xlu0 %376, %v373
        %v378 = vpop.permute.xlu0 %377
        %381 = vset.pattern.permute.xlu0 0
        %382 = vperm.xlu0 %381, %v374
        %v383 = vpop.permute.xlu0 %382
        %vm385 = vcmask 72704
        %v387 = vsel %vm385, %v371, 0
        %v390 = vsel %vm385, %v372, 0
        %vm392 = vcmask 1040384
        %v394 = vsel %vm392, %v370, 0
        %396 = vmatprep.subr.mxu0 0.0
        %v397 = vand.u32 %v369, 4294901760
        %398 = vmatpush1.msra.mxu0 %v397
        %399 = vmatprep.subr.mxu0 0.0
        %v400 = vand.u32 %v394, 4294901760
        %401 = vmatpush1.msra.mxu0 %v400
        %402 = vmatprep.subr.mxu0 0.0
        %403 = vmatpush1.msra.mxu0 0.0
        %404 = vmatprep.subr.mxu0 0.0
        %405 = vmatpush1.msra.mxu0 0.0
        %406 = vmatprep.subr.mxu0 0.0
        %407 = vmatpush1.msra.mxu0 0.0
        %408 = vmatprep.subr.mxu0 0.0
        %409 = vmatpush1.msra.mxu0 0.0
        %410 = vmatprep.subr.mxu0 0.0
        %411 = vmatpush1.msra.mxu0 0.0
        %412 = vmatprep.subr.mxu0 0.0
        %413 = vmatpush1.msra.mxu0 0.0
        %414 = vmatprep.subr.mxu0 0.0
        %415 = vmatpush1.msra.mxu0 0.0
        %416 = vmatprep.subr.mxu0 0.0
        %417 = vmatpush1.msra.mxu0 0.0
        %418 = vmatprep.subr.mxu0 0.0
        %419 = vmatpush1.msra.mxu0 0.0
        %420 = vmatprep.subr.mxu0 0.0
        %421 = vmatpush1.msra.mxu0 0.0
        %422 = vmatprep.subr.mxu0 0.0
        %423 = vmatpush1.msra.mxu0 0.0
        %424 = vmatprep.subr.mxu0 0.0
        %425 = vmatpush1.msra.mxu0 0.0
        %426 = vmatprep.subr.mxu0 0.0
        %427 = vmatpush1.msra.mxu0 0.0
        %428 = vmatprep.subr.mxu0 0.0
        %429 = vmatpush1.msra.mxu0 0.0
        %430 = vmatprep.subr.mxu0 0.0
        %431 = vmatpush1.msra.mxu0 0.0
        %432 = vmatprep.subr.mxu0 0.0
        %433 = vmatpush1.msra.mxu0 0.0
        %434 = vmatprep.subr.mxu0 0.0
        %435 = vmatpush1.msra.mxu0 0.0
        %436 = vmatprep.subr.mxu0 0.0
        %437 = vmatpush1.msra.mxu0 0.0
        %438 = vmatprep.subr.mxu0 0.0
        %439 = vmatpush1.msra.mxu0 0.0
        %440 = vmatprep.subr.mxu0 0.0
        %441 = vmatpush1.msra.mxu0 0.0
        %442 = vmatprep.subr.mxu0 0.0
        %443 = vmatpush1.msra.mxu0 0.0
        %444 = vmatprep.subr.mxu0 0.0
        %445 = vmatpush1.msra.mxu0 0.0
        %446 = vmatprep.subr.mxu0 0.0
        %447 = vmatpush1.msra.mxu0 0.0
        %448 = vmatprep.subr.mxu0 0.0
        %449 = vmatpush1.msra.mxu0 0.0
        %450 = vmatprep.subr.mxu0 0.0
        %451 = vmatpush1.msra.mxu0 0.0
        %452 = vmatprep.subr.mxu0 0.0
        %453 = vmatpush1.msra.mxu0 0.0
        %454 = vmatprep.subr.mxu0 0.0
        %455 = vmatpush1.msra.mxu0 0.0
        %456 = vmatprep.subr.mxu0 0.0
        %457 = vmatpush1.msra.mxu0 0.0
        %458 = vmatprep.subr.mxu0 0.0
        %459 = vmatpush1.msra.mxu0 0.0
        %460 = vmatprep.subr.mxu0 0.0
        %461 = vmatpush1.msra.mxu0 0.0
        %462 = vmatprep.mubr.f32.mxu0 0.0
        %v463 = vand.u32 %v387, 4294901760
        %v464 = vsub.f32 %v387, %v463
        %v465 = vand.u32 %v464, 4294901760
        %v466 = vsub.f32 %v464, %v465
        %v467 = vand.u32 %v466, 4294901760
        %468 = vmatmul.mubr.f32.gmra.mrb[0].mxu0 %v467
        %v469 = vpop.f32.mrb[0].mxu0
        %v470 = vadd.f32 %v378, %v469
        %v471 = vpop.f32.mrb[0].mxu0
        %472 = vmatprep.mubr.f32.mxu0 0.0
        %v473 = vand.u32 %v390, 4294901760
        %v474 = vsub.f32 %v390, %v473
        %v475 = vand.u32 %v474, 4294901760
        %v476 = vsub.f32 %v474, %v475
        %v477 = vand.u32 %v476, 4294901760
        %478 = vmatmul.mubr.f32.gmra.mrb[0].mxu0 %v477
        %v479 = vpop.f32.mrb[0].mxu0
        %v480 = vadd.f32 %v383, %v479
        %v481 = vpop.f32.mrb[0].mxu0
        %482 = vdwg.mxu0
        %483 = vmatprep.subr.mxu0 0.0
        %v484 = vand.u32 %v369, 4294901760
        %v485 = vsub.f32 %v369, %v484
        %v486 = vand.u32 %v485, 4294901760
        %v487 = vsub.f32 %v485, %v486
        %v488 = vand.u32 %v487, 4294901760
        %489 = vmatpush1.msra.mxu0 %v488
        %490 = vmatprep.subr.mxu0 0.0
        %v491 = vand.u32 %v394, 4294901760
        %v492 = vsub.f32 %v394, %v491
        %v493 = vand.u32 %v492, 4294901760
        %v494 = vsub.f32 %v492, %v493
        %v495 = vand.u32 %v494, 4294901760
        %496 = vmatpush1.msra.mxu0 %v495
        %497 = vmatprep.subr.mxu0 0.0
        %498 = vmatpush1.msra.mxu0 0.0
        %499 = vmatprep.subr.mxu0 0.0
        %500 = vmatpush1.msra.mxu0 0.0
        %501 = vmatprep.subr.mxu0 0.0
        %502 = vmatpush1.msra.mxu0 0.0
        %503 = vmatprep.subr.mxu0 0.0
        %504 = vmatpush1.msra.mxu0 0.0
        %505 = vmatprep.subr.mxu0 0.0
        %506 = vmatpush1.msra.mxu0 0.0
        %507 = vmatprep.subr.mxu0 0.0
        %508 = vmatpush1.msra.mxu0 0.0
        %509 = vmatprep.subr.mxu0 0.0
        %510 = vmatpush1.msra.mxu0 0.0
        %511 = vmatprep.subr.mxu0 0.0
        %512 = vmatpush1.msra.mxu0 0.0
        %513 = vmatprep.subr.mxu0 0.0
        %514 = vmatpush1.msra.mxu0 0.0
        %515 = vmatprep.subr.mxu0 0.0
        %516 = vmatpush1.msra.mxu0 0.0
        %517 = vmatprep.subr.mxu0 0.0
        %518 = vmatpush1.msra.mxu0 0.0
        %519 = vmatprep.subr.mxu0 0.0
        %520 = vmatpush1.msra.mxu0 0.0
        %521 = vmatprep.subr.mxu0 0.0
        %522 = vmatpush1.msra.mxu0 0.0
        %523 = vmatprep.subr.mxu0 0.0
        %524 = vmatpush1.msra.mxu0 0.0
        %525 = vmatprep.subr.mxu0 0.0
        %526 = vmatpush1.msra.mxu0 0.0
        %527 = vmatprep.subr.mxu0 0.0
        %528 = vmatpush1.msra.mxu0 0.0
        %529 = vmatprep.subr.mxu0 0.0
        %530 = vmatpush1.msra.mxu0 0.0
        %531 = vmatprep.subr.mxu0 0.0
        %532 = vmatpush1.msra.mxu0 0.0
        %533 = vmatprep.subr.mxu0 0.0
        %534 = vmatpush1.msra.mxu0 0.0
        %535 = vmatprep.subr.mxu0 0.0
        %536 = vmatpush1.msra.mxu0 0.0
        %537 = vmatprep.subr.mxu0 0.0
        %538 = vmatpush1.msra.mxu0 0.0
        %539 = vmatprep.subr.mxu0 0.0
        %540 = vmatpush1.msra.mxu0 0.0
        %541 = vmatprep.subr.mxu0 0.0
        %542 = vmatpush1.msra.mxu0 0.0
        %543 = vmatprep.subr.mxu0 0.0
        %544 = vmatpush1.msra.mxu0 0.0
        %545 = vmatprep.subr.mxu0 0.0
        %546 = vmatpush1.msra.mxu0 0.0
        %547 = vmatprep.subr.mxu0 0.0
        %548 = vmatpush1.msra.mxu0 0.0
        %549 = vmatprep.subr.mxu0 0.0
        %550 = vmatpush1.msra.mxu0 0.0
        %551 = vmatprep.subr.mxu0 0.0
        %552 = vmatpush1.msra.mxu0 0.0
        %553 = vmatprep.subr.mxu0 0.0
        %554 = vmatpush1.msra.mxu0 0.0
        %555 = vmatprep.subr.mxu0 0.0
        %556 = vmatpush1.msra.mxu0 0.0
        %557 = vmatprep.mubr.f32.mxu0 0.0
        %v558 = vand.u32 %v387, 4294901760
        %559 = vmatmul.mubr.f32.gmra.mrb[0].mxu0 %v558
        %v560 = vpop.f32.mrb[0].mxu0
        %v561 = vadd.f32 %v470, %v560
        %v562 = vpop.f32.mrb[0].mxu0
        %563 = vmatprep.mubr.f32.mxu0 0.0
        %v564 = vand.u32 %v390, 4294901760
        %565 = vmatmul.mubr.f32.gmra.mrb[0].mxu0 %v564
        %v566 = vpop.f32.mrb[0].mxu0
        %v567 = vadd.f32 %v480, %v566
        %v568 = vpop.f32.mrb[0].mxu0
        %569 = vdwg.mxu0
        %570 = vmatprep.subr.mxu0 0.0
        %v571 = vand.u32 %v369, 4294901760
        %v572 = vsub.f32 %v369, %v571
        %573 = vmatpush1.msra.mxu0 %v572
        %574 = vmatprep.subr.mxu0 0.0
        %v575 = vand.u32 %v394, 4294901760
        %v576 = vsub.f32 %v394, %v575
        %577 = vmatpush1.msra.mxu0 %v576
        %578 = vmatprep.subr.mxu0 0.0
        %579 = vmatpush1.msra.mxu0 0.0
        %580 = vmatprep.subr.mxu0 0.0
        %581 = vmatpush1.msra.mxu0 0.0
        %582 = vmatprep.subr.mxu0 0.0
        %583 = vmatpush1.msra.mxu0 0.0
        %584 = vmatprep.subr.mxu0 0.0
        %585 = vmatpush1.msra.mxu0 0.0
        %586 = vmatprep.subr.mxu0 0.0
        %587 = vmatpush1.msra.mxu0 0.0
        %588 = vmatprep.subr.mxu0 0.0
        %589 = vmatpush1.msra.mxu0 0.0
        %590 = vmatprep.subr.mxu0 0.0
        %591 = vmatpush1.msra.mxu0 0.0
        %592 = vmatprep.subr.mxu0 0.0
        %593 = vmatpush1.msra.mxu0 0.0
        %594 = vmatprep.subr.mxu0 0.0
        %595 = vmatpush1.msra.mxu0 0.0
        %596 = vmatprep.subr.mxu0 0.0
        %597 = vmatpush1.msra.mxu0 0.0
        %598 = vmatprep.subr.mxu0 0.0
        %599 = vmatpush1.msra.mxu0 0.0
        %600 = vmatprep.subr.mxu0 0.0
        %601 = vmatpush1.msra.mxu0 0.0
        %602 = vmatprep.subr.mxu0 0.0
        %603 = vmatpush1.msra.mxu0 0.0
        %604 = vmatprep.subr.mxu0 0.0
        %605 = vmatpush1.msra.mxu0 0.0
        %606 = vmatprep.subr.mxu0 0.0
        %607 = vmatpush1.msra.mxu0 0.0
        %608 = vmatprep.subr.mxu0 0.0
        %609 = vmatpush1.msra.mxu0 0.0
        %610 = vmatprep.subr.mxu0 0.0
        %611 = vmatpush1.msra.mxu0 0.0
        %612 = vmatprep.subr.mxu0 0.0
        %613 = vmatpush1.msra.mxu0 0.0
        %614 = vmatprep.subr.mxu0 0.0
        %615 = vmatpush1.msra.mxu0 0.0
        %616 = vmatprep.subr.mxu0 0.0
        %617 = vmatpush1.msra.mxu0 0.0
        %618 = vmatprep.subr.mxu0 0.0
        %619 = vmatpush1.msra.mxu0 0.0
        %620 = vmatprep.subr.mxu0 0.0
        %621 = vmatpush1.msra.mxu0 0.0
        %622 = vmatprep.subr.mxu0 0.0
        %623 = vmatpush1.msra.mxu0 0.0
        %624 = vmatprep.subr.mxu0 0.0
        %625 = vmatpush1.msra.mxu0 0.0
        %626 = vmatprep.subr.mxu0 0.0
        %627 = vmatpush1.msra.mxu0 0.0
        %628 = vmatprep.subr.mxu0 0.0
        %629 = vmatpush1.msra.mxu0 0.0
        %630 = vmatprep.subr.mxu0 0.0
        %631 = vmatpush1.msra.mxu0 0.0
        %632 = vmatprep.subr.mxu0 0.0
        %633 = vmatpush1.msra.mxu0 0.0
        %634 = vmatprep.subr.mxu0 0.0
        %635 = vmatpush1.msra.mxu0 0.0
        %636 = vmatprep.subr.mxu0 0.0
        %637 = vmatpush1.msra.mxu0 0.0
        %638 = vmatprep.mubr.f32.mxu0 0.0
        %v639 = vand.u32 %v387, 4294901760
        %v640 = vsub.f32 %v387, %v639
        %641 = vmatmul.mubr.f32.gmra.mrb[0].mxu0 %v640
        %v642 = vpop.f32.mrb[0].mxu0
        %v643 = vadd.f32 %v561, %v642
        %v644 = vpop.f32.mrb[0].mxu0
        %645 = vmatprep.mubr.f32.mxu0 0.0
        %v646 = vand.u32 %v390, 4294901760
        %v647 = vsub.f32 %v390, %v646
        %648 = vmatmul.mubr.f32.gmra.mrb[0].mxu0 %v647
        %v649 = vpop.f32.mrb[0].mxu0
        %v650 = vadd.f32 %v567, %v649
        %v651 = vpop.f32.mrb[0].mxu0
        %652 = vdwg.mxu0
        %653 = vmatprep.subr.mxu0 0.0
        %v654 = vand.u32 %v369, 4294901760
        %655 = vmatpush1.msra.mxu0 %v654
        %656 = vmatprep.subr.mxu0 0.0
        %v657 = vand.u32 %v394, 4294901760
        %658 = vmatpush1.msra.mxu0 %v657
        %659 = vmatprep.subr.mxu0 0.0
        %660 = vmatpush1.msra.mxu0 0.0
        %661 = vmatprep.subr.mxu0 0.0
        %662 = vmatpush1.msra.mxu0 0.0
        %663 = vmatprep.subr.mxu0 0.0
        %664 = vmatpush1.msra.mxu0 0.0
        %665 = vmatprep.subr.mxu0 0.0
        %666 = vmatpush1.msra.mxu0 0.0
        %667 = vmatprep.subr.mxu0 0.0
        %668 = vmatpush1.msra.mxu0 0.0
        %669 = vmatprep.subr.mxu0 0.0
        %670 = vmatpush1.msra.mxu0 0.0
        %671 = vmatprep.subr.mxu0 0.0
        %672 = vmatpush1.msra.mxu0 0.0
        %673 = vmatprep.subr.mxu0 0.0
        %674 = vmatpush1.msra.mxu0 0.0
        %675 = vmatprep.subr.mxu0 0.0
        %676 = vmatpush1.msra.mxu0 0.0
        %677 = vmatprep.subr.mxu0 0.0
        %678 = vmatpush1.msra.mxu0 0.0
        %679 = vmatprep.subr.mxu0 0.0
        %680 = vmatpush1.msra.mxu0 0.0
        %681 = vmatprep.subr.mxu0 0.0
        %682 = vmatpush1.msra.mxu0 0.0
        %683 = vmatprep.subr.mxu0 0.0
        %684 = vmatpush1.msra.mxu0 0.0
        %685 = vmatprep.subr.mxu0 0.0
        %686 = vmatpush1.msra.mxu0 0.0
        %687 = vmatprep.subr.mxu0 0.0
        %688 = vmatpush1.msra.mxu0 0.0
        %689 = vmatprep.subr.mxu0 0.0
        %690 = vmatpush1.msra.mxu0 0.0
        %691 = vmatprep.subr.mxu0 0.0
        %692 = vmatpush1.msra.mxu0 0.0
        %693 = vmatprep.subr.mxu0 0.0
        %694 = vmatpush1.msra.mxu0 0.0
        %695 = vmatprep.subr.mxu0 0.0
        %696 = vmatpush1.msra.mxu0 0.0
        %697 = vmatprep.subr.mxu0 0.0
        %698 = vmatpush1.msra.mxu0 0.0
        %699 = vmatprep.subr.mxu0 0.0
        %700 = vmatpush1.msra.mxu0 0.0
        %701 = vmatprep.subr.mxu0 0.0
        %702 = vmatpush1.msra.mxu0 0.0
        %703 = vmatprep.subr.mxu0 0.0
        %704 = vmatpush1.msra.mxu0 0.0
        %705 = vmatprep.subr.mxu0 0.0
        %706 = vmatpush1.msra.mxu0 0.0
        %707 = vmatprep.subr.mxu0 0.0
        %708 = vmatpush1.msra.mxu0 0.0
        %709 = vmatprep.subr.mxu0 0.0
        %710 = vmatpush1.msra.mxu0 0.0
        %711 = vmatprep.subr.mxu0 0.0
        %712 = vmatpush1.msra.mxu0 0.0
        %713 = vmatprep.subr.mxu0 0.0
        %714 = vmatpush1.msra.mxu0 0.0
        %715 = vmatprep.subr.mxu0 0.0
        %716 = vmatpush1.msra.mxu0 0.0
        %717 = vmatprep.subr.mxu0 0.0
        %718 = vmatpush1.msra.mxu0 0.0
        %719 = vmatprep.mubr.f32.mxu0 0.0
        %v720 = vand.u32 %v387, 4294901760
        %v721 = vsub.f32 %v387, %v720
        %v722 = vand.u32 %v721, 4294901760
        %723 = vmatmul.mubr.f32.gmra.mrb[0].mxu0 %v722
        %v724 = vpop.f32.mrb[0].mxu0
        %v725 = vadd.f32 %v643, %v724
        %v726 = vpop.f32.mrb[0].mxu0
        %727 = vmatprep.mubr.f32.mxu0 0.0
        %v728 = vand.u32 %v390, 4294901760
        %v729 = vsub.f32 %v390, %v728
        %v730 = vand.u32 %v729, 4294901760
        %731 = vmatmul.mubr.f32.gmra.mrb[0].mxu0 %v730
        %v732 = vpop.f32.mrb[0].mxu0
        %v733 = vadd.f32 %v650, %v732
        %v734 = vpop.f32.mrb[0].mxu0
        %735 = vdwg.mxu0
        %736 = vmatprep.subr.mxu0 0.0
        %v737 = vand.u32 %v369, 4294901760
        %v738 = vsub.f32 %v369, %v737
        %v739 = vand.u32 %v738, 4294901760
        %740 = vmatpush1.msra.mxu0 %v739
        %741 = vmatprep.subr.mxu0 0.0
        %v742 = vand.u32 %v394, 4294901760
        %v743 = vsub.f32 %v394, %v742
        %v744 = vand.u32 %v743, 4294901760
        %745 = vmatpush1.msra.mxu0 %v744
        %746 = vmatprep.subr.mxu0 0.0
        %747 = vmatpush1.msra.mxu0 0.0
        %748 = vmatprep.subr.mxu0 0.0
        %749 = vmatpush1.msra.mxu0 0.0
        %750 = vmatprep.subr.mxu0 0.0
        %751 = vmatpush1.msra.mxu0 0.0
        %752 = vmatprep.subr.mxu0 0.0
        %753 = vmatpush1.msra.mxu0 0.0
        %754 = vmatprep.subr.mxu0 0.0
        %755 = vmatpush1.msra.mxu0 0.0
        %756 = vmatprep.subr.mxu0 0.0
        %757 = vmatpush1.msra.mxu0 0.0
        %758 = vmatprep.subr.mxu0 0.0
        %759 = vmatpush1.msra.mxu0 0.0
        %760 = vmatprep.subr.mxu0 0.0
        %761 = vmatpush1.msra.mxu0 0.0
        %762 = vmatprep.subr.mxu0 0.0
        %763 = vmatpush1.msra.mxu0 0.0
        %764 = vmatprep.subr.mxu0 0.0
        %765 = vmatpush1.msra.mxu0 0.0
        %766 = vmatprep.subr.mxu0 0.0
        %767 = vmatpush1.msra.mxu0 0.0
        %768 = vmatprep.subr.mxu0 0.0
        %769 = vmatpush1.msra.mxu0 0.0
        %770 = vmatprep.subr.mxu0 0.0
        %771 = vmatpush1.msra.mxu0 0.0
        %772 = vmatprep.subr.mxu0 0.0
        %773 = vmatpush1.msra.mxu0 0.0
        %774 = vmatprep.subr.mxu0 0.0
        %775 = vmatpush1.msra.mxu0 0.0
        %776 = vmatprep.subr.mxu0 0.0
        %777 = vmatpush1.msra.mxu0 0.0
        %778 = vmatprep.subr.mxu0 0.0
        %779 = vmatpush1.msra.mxu0 0.0
        %780 = vmatprep.subr.mxu0 0.0
        %781 = vmatpush1.msra.mxu0 0.0
        %782 = vmatprep.subr.mxu0 0.0
        %783 = vmatpush1.msra.mxu0 0.0
        %784 = vmatprep.subr.mxu0 0.0
        %785 = vmatpush1.msra.mxu0 0.0
        %786 = vmatprep.subr.mxu0 0.0
        %787 = vmatpush1.msra.mxu0 0.0
        %788 = vmatprep.subr.mxu0 0.0
        %789 = vmatpush1.msra.mxu0 0.0
        %790 = vmatprep.subr.mxu0 0.0
        %791 = vmatpush1.msra.mxu0 0.0
        %792 = vmatprep.subr.mxu0 0.0
        %793 = vmatpush1.msra.mxu0 0.0
        %794 = vmatprep.subr.mxu0 0.0
        %795 = vmatpush1.msra.mxu0 0.0
        %796 = vmatprep.subr.mxu0 0.0
        %797 = vmatpush1.msra.mxu0 0.0
        %798 = vmatprep.subr.mxu0 0.0
        %799 = vmatpush1.msra.mxu0 0.0
        %800 = vmatprep.subr.mxu0 0.0
        %801 = vmatpush1.msra.mxu0 0.0
        %802 = vmatprep.subr.mxu0 0.0
        %803 = vmatpush1.msra.mxu0 0.0
        %804 = vmatprep.subr.mxu0 0.0
        %805 = vmatpush1.msra.mxu0 0.0
        %806 = vmatprep.mubr.f32.mxu0 0.0
        %v807 = vand.u32 %v387, 4294901760
        %808 = vmatmul.mubr.f32.gmra.mrb[0].mxu0 %v807
        %v809 = vpop.f32.mrb[0].mxu0
        %v810 = vadd.f32 %v725, %v809
        %v811 = vpop.f32.mrb[0].mxu0
        %812 = vmatprep.mubr.f32.mxu0 0.0
        %v813 = vand.u32 %v390, 4294901760
        %814 = vmatmul.mubr.f32.gmra.mrb[0].mxu0 %v813
        %v815 = vpop.f32.mrb[0].mxu0
        %v816 = vadd.f32 %v733, %v815
        %v817 = vpop.f32.mrb[0].mxu0
        %818 = vdwg.mxu0
        %819 = vmatprep.subr.mxu0 0.0
        %v820 = vand.u32 %v369, 4294901760
        %821 = vmatpush1.msra.mxu0 %v820
        %822 = vmatprep.subr.mxu0 0.0
        %v823 = vand.u32 %v394, 4294901760
        %824 = vmatpush1.msra.mxu0 %v823
        %825 = vmatprep.subr.mxu0 0.0
        %826 = vmatpush1.msra.mxu0 0.0
        %827 = vmatprep.subr.mxu0 0.0
        %828 = vmatpush1.msra.mxu0 0.0
        %829 = vmatprep.subr.mxu0 0.0
        %830 = vmatpush1.msra.mxu0 0.0
        %831 = vmatprep.subr.mxu0 0.0
        %832 = vmatpush1.msra.mxu0 0.0
        %833 = vmatprep.subr.mxu0 0.0
        %834 = vmatpush1.msra.mxu0 0.0
        %835 = vmatprep.subr.mxu0 0.0
        %836 = vmatpush1.msra.mxu0 0.0
        %837 = vmatprep.subr.mxu0 0.0
        %838 = vmatpush1.msra.mxu0 0.0
        %839 = vmatprep.subr.mxu0 0.0
        %840 = vmatpush1.msra.mxu0 0.0
        %841 = vmatprep.subr.mxu0 0.0
        %842 = vmatpush1.msra.mxu0 0.0
        %843 = vmatprep.subr.mxu0 0.0
        %844 = vmatpush1.msra.mxu0 0.0
        %845 = vmatprep.subr.mxu0 0.0
        %846 = vmatpush1.msra.mxu0 0.0
        %847 = vmatprep.subr.mxu0 0.0
        %848 = vmatpush1.msra.mxu0 0.0
        %849 = vmatprep.subr.mxu0 0.0
        %850 = vmatpush1.msra.mxu0 0.0
        %851 = vmatprep.subr.mxu0 0.0
        %852 = vmatpush1.msra.mxu0 0.0
        %853 = vmatprep.subr.mxu0 0.0
        %854 = vmatpush1.msra.mxu0 0.0
        %855 = vmatprep.subr.mxu0 0.0
        %856 = vmatpush1.msra.mxu0 0.0
        %857 = vmatprep.subr.mxu0 0.0
        %858 = vmatpush1.msra.mxu0 0.0
        %859 = vmatprep.subr.mxu0 0.0
        %860 = vmatpush1.msra.mxu0 0.0
        %861 = vmatprep.subr.mxu0 0.0
        %862 = vmatpush1.msra.mxu0 0.0
        %863 = vmatprep.subr.mxu0 0.0
        %864 = vmatpush1.msra.mxu0 0.0
        %865 = vmatprep.subr.mxu0 0.0
        %866 = vmatpush1.msra.mxu0 0.0
        %867 = vmatprep.subr.mxu0 0.0
        %868 = vmatpush1.msra.mxu0 0.0
        %869 = vmatprep.subr.mxu0 0.0
        %870 = vmatpush1.msra.mxu0 0.0
        %871 = vmatprep.subr.mxu0 0.0
        %872 = vmatpush1.msra.mxu0 0.0
        %873 = vmatprep.subr.mxu0 0.0
        %874 = vmatpush1.msra.mxu0 0.0
        %875 = vmatprep.subr.mxu0 0.0
        %876 = vmatpush1.msra.mxu0 0.0
        %877 = vmatprep.subr.mxu0 0.0
        %878 = vmatpush1.msra.mxu0 0.0
        %879 = vmatprep.subr.mxu0 0.0
        %880 = vmatpush1.msra.mxu0 0.0
        %881 = vmatprep.subr.mxu0 0.0
        %882 = vmatpush1.msra.mxu0 0.0
        %883 = vmatprep.subr.mxu0 0.0
        %884 = vmatpush1.msra.mxu0 0.0
        %885 = vmatprep.mubr.f32.mxu0 0.0
        %v886 = vand.u32 %v387, 4294901760
        %887 = vmatmul.mubr.f32.gmra.mrb[0].mxu0 %v886
        %v888 = vpop.f32.mrb[0].mxu0
        %v889 = vadd.f32 %v810, %v888
        %v890 = vpop.f32.mrb[0].mxu0
        %891 = vmatprep.mubr.f32.mxu0 0.0
        %v892 = vand.u32 %v390, 4294901760
        %893 = vmatmul.mubr.f32.gmra.mrb[0].mxu0 %v892
        %v894 = vpop.f32.mrb[0].mxu0
        %v895 = vadd.f32 %v816, %v894
        %v896 = vpop.f32.mrb[0].mxu0
        %897 = vdwg.mxu0
        %v898 = vmax.f32 %v889, 0.0
        %v899 = vmax.f32 %v895, 0.0
        %v900 = vld [vmem:[%s3] sm:$0xff]
        %v901 = vld [vmem:[%s3 + $0x8] sm:$0xff]
        %v902 = vld [vmem:[%s3 + $0x10] sm:$0xf]
        %v903 = vld [vmem:[%s4] sm:$0xff]
        %v904 = vld [vmem:[%s4 + $0x8] sm:$0xff]
        %v905 = vld [vmem:[%s4 + $0x10] sm:$0xf]
        %907 = vset.pattern.permute.xlu0 0
        %908 = vperm.xlu0 %907, %v903
        %v909 = vpop.permute.xlu0 %908
        %912 = vset.pattern.permute.xlu0 0
        %913 = vperm.xlu0 %912, %v904
        %v914 = vpop.permute.xlu0 %913
        %917 = vset.pattern.permute.xlu0 0
        %918 = vperm.xlu0 %917, %v905
        %v919 = vpop.permute.xlu0 %918
        %vm921 = vcmask 80896
        %v923 = vsel %vm921, %v900, 0
        %v926 = vsel %vm921, %v901, 0
        %v929 = vsel %vm921, %v902, 0
        %vm931 = vcmask 1041408
        %v933 = vsel %vm931, %v899, 0
        %935 = vmatprep.subr.mxu0 0.0
        %v936 = vand.u32 %v898, 4294901760
        %937 = vmatpush1.msra.mxu0 %v936
        %938 = vmatprep.subr.mxu0 0.0
        %v939 = vand.u32 %v933, 4294901760
        %940 = vmatpush1.msra.mxu0 %v939
        %941 = vmatprep.subr.mxu0 0.0
        %942 = vmatpush1.msra.mxu0 0.0
        %943 = vmatprep.subr.mxu0 0.0
        %944 = vmatpush1.msra.mxu0 0.0
        %945 = vmatprep.subr.mxu0 0.0
        %946 = vmatpush1.msra.mxu0 0.0
        %947 = vmatprep.subr.mxu0 0.0
        %948 = vmatpush1.msra.mxu0 0.0
        %949 = vmatprep.subr.mxu0 0.0
        %950 = vmatpush1.msra.mxu0 0.0
        %951 = vmatprep.subr.mxu0 0.0
        %952 = vmatpush1.msra.mxu0 0.0
        %953 = vmatprep.subr.mxu0 0.0
        %954 = vmatpush1.msra.mxu0 0.0
        %955 = vmatprep.subr.mxu0 0.0
        %956 = vmatpush1.msra.mxu0 0.0
        %957 = vmatprep.subr.mxu0 0.0
        %958 = vmatpush1.msra.mxu0 0.0
        %959 = vmatprep.subr.mxu0 0.0
        %960 = vmatpush1.msra.mxu0 0.0
        %961 = vmatprep.subr.mxu0 0.0
        %962 = vmatpush1.msra.mxu0 0.0
        %963 = vmatprep.subr.mxu0 0.0
        %964 = vmatpush1.msra.mxu0 0.0
        %965 = vmatprep.subr.mxu0 0.0
        %966 = vmatpush1.msra.mxu0 0.0
        %967 = vmatprep.subr.mxu0 0.0
        %968 = vmatpush1.msra.mxu0 0.0
        %969 = vmatprep.subr.mxu0 0.0
        %970 = vmatpush1.msra.mxu0 0.0
        %971 = vmatprep.subr.mxu0 0.0
        %972 = vmatpush1.msra.mxu0 0.0
        %973 = vmatprep.subr.mxu0 0.0
        %974 = vmatpush1.msra.mxu0 0.0
        %975 = vmatprep.subr.mxu0 0.0
        %976 = vmatpush1.msra.mxu0 0.0
        %977 = vmatprep.subr.mxu0 0.0
        %978 = vmatpush1.msra.mxu0 0.0
        %979 = vmatprep.subr.mxu0 0.0
        %980 = vmatpush1.msra.mxu0 0.0
        %981 = vmatprep.subr.mxu0 0.0
        %982 = vmatpush1.msra.mxu0 0.0
        %983 = vmatprep.subr.mxu0 0.0
        %984 = vmatpush1.msra.mxu0 0.0
        %985 = vmatprep.subr.mxu0 0.0
        %986 = vmatpush1.msra.mxu0 0.0
        %987 = vmatprep.subr.mxu0 0.0
        %988 = vmatpush1.msra.mxu0 0.0
        %989 = vmatprep.subr.mxu0 0.0
        %990 = vmatpush1.msra.mxu0 0.0
        %991 = vmatprep.subr.mxu0 0.0
        %992 = vmatpush1.msra.mxu0 0.0
        %993 = vmatprep.subr.mxu0 0.0
        %994 = vmatpush1.msra.mxu0 0.0
        %995 = vmatprep.subr.mxu0 0.0
        %996 = vmatpush1.msra.mxu0 0.0
        %997 = vmatprep.subr.mxu0 0.0
        %998 = vmatpush1.msra.mxu0 0.0
        %999 = vmatprep.subr.mxu0 0.0
        %1000 = vmatpush1.msra.mxu0 0.0
        %1001 = vmatprep.mubr.f32.mxu0 0.0
        %v1002 = vand.u32 %v923, 4294901760
        %v1003 = vsub.f32 %v923, %v1002
        %v1004 = vand.u32 %v1003, 4294901760
        %v1005 = vsub.f32 %v1003, %v1004
        %v1006 = vand.u32 %v1005, 4294901760
        %1007 = vmatmul.mubr.f32.gmra.mrb[0].mxu0 %v1006
        %v1008 = vpop.f32.mrb[0].mxu0
        %v1009 = vadd.f32 %v909, %v1008
        %v1010 = vpop.f32.mrb[0].mxu0
        %1011 = vmatprep.mubr.f32.mxu0 0.0
        %v1012 = vand.u32 %v926, 4294901760
        %v1013 = vsub.f32 %v926, %v1012
        %v1014 = vand.u32 %v1013, 4294901760
        %v1015 = vsub.f32 %v1013, %v1014
        %v1016 = vand.u32 %v1015, 4294901760
        %1017 = vmatmul.mubr.f32.gmra.mrb[0].mxu0 %v1016
        %v1018 = vpop.f32.mrb[0].mxu0
        %v1019 = vadd.f32 %v914, %v1018
        %v1020 = vpop.f32.mrb[0].mxu0
        %1021 = vmatprep.mubr.f32.mxu0 0.0
        %v1022 = vand.u32 %v929, 4294901760
        %v1023 = vsub.f32 %v929, %v1022
        %v1024 = vand.u32 %v1023, 4294901760
        %v1025 = vsub.f32 %v1023, %v1024
        %v1026 = vand.u32 %v1025, 4294901760
        %1027 = vmatmul.mubr.f32.gmra.mrb[0].mxu0 %v1026
        %v1028 = vpop.f32.mrb[0].mxu0
        %v1029 = vadd.f32 %v919, %v1028
        %v1030 = vpop.f32.mrb[0].mxu0
        %1031 = vdwg.mxu0
        %1032 = vmatprep.subr.mxu0 0.0
        %v1033 = vand.u32 %v898, 4294901760
        %v1034 = vsub.f32 %v898, %v1033
        %v1035 = vand.u32 %v1034, 4294901760
        %v1036 = vsub.f32 %v1034, %v1035
        %v1037 = vand.u32 %v1036, 4294901760
        %1038 = vmatpush1.msra.mxu0 %v1037
        %1039 = vmatprep.subr.mxu0 0.0
        %v1040 = vand.u32 %v933, 4294901760
        %v1041 = vsub.f32 %v933, %v1040
        %v1042 = vand.u32 %v1041, 4294901760
        %v1043 = vsub.f32 %v1041, %v1042
        %v1044 = vand.u32 %v1043, 4294901760
        %1045 = vmatpush1.msra.mxu0 %v1044
        %1046 = vmatprep.subr.mxu0 0.0
        %1047 = vmatpush1.msra.mxu0 0.0
        %1048 = vmatprep.subr.mxu0 0.0
        %1049 = vmatpush1.msra.mxu0 0.0
        %1050 = vmatprep.subr.mxu0 0.0
        %1051 = vmatpush1.msra.mxu0 0.0
        %1052 = vmatprep.subr.mxu0 0.0
        %1053 = vmatpush1.msra.mxu0 0.0
        %1054 = vmatprep.subr.mxu0 0.0
        %1055 = vmatpush1.msra.mxu0 0.0
        %1056 = vmatprep.subr.mxu0 0.0
        %1057 = vmatpush1.msra.mxu0 0.0
        %1058 = vmatprep.subr.mxu0 0.0
        %1059 = vmatpush1.msra.mxu0 0.0
        %1060 = vmatprep.subr.mxu0 0.0
        %1061 = vmatpush1.msra.mxu0 0.0
        %1062 = vmatprep.subr.mxu0 0.0
        %1063 = vmatpush1.msra.mxu0 0.0
        %1064 = vmatprep.subr.mxu0 0.0
        %1065 = vmatpush1.msra.mxu0 0.0
        %1066 = vmatprep.subr.mxu0 0.0
        %1067 = vmatpush1.msra.mxu0 0.0
        %1068 = vmatprep.subr.mxu0 0.0
        %1069 = vmatpush1.msra.mxu0 0.0
        %1070 = vmatprep.subr.mxu0 0.0
        %1071 = vmatpush1.msra.mxu0 0.0
        %1072 = vmatprep.subr.mxu0 0.0
        %1073 = vmatpush1.msra.mxu0 0.0
        %1074 = vmatprep.subr.mxu0 0.0
        %1075 = vmatpush1.msra.mxu0 0.0
        %1076 = vmatprep.subr.mxu0 0.0
        %1077 = vmatpush1.msra.mxu0 0.0
        %1078 = vmatprep.subr.mxu0 0.0
        %1079 = vmatpush1.msra.mxu0 0.0
        %1080 = vmatprep.subr.mxu0 0.0
        %1081 = vmatpush1.msra.mxu0 0.0
        %1082 = vmatprep.subr.mxu0 0.0
        %1083 = vmatpush1.msra.mxu0 0.0
        %1084 = vmatprep.subr.mxu0 0.0
        %1085 = vmatpush1.msra.mxu0 0.0
        %1086 = vmatprep.subr.mxu0 0.0
        %1087 = vmatpush1.msra.mxu0 0.0
        %1088 = vmatprep.subr.mxu0 0.0
        %1089 = vmatpush1.msra.mxu0 0.0
        %1090 = vmatprep.subr.mxu0 0.0
        %1091 = vmatpush1.msra.mxu0 0.0
        %1092 = vmatprep.subr.mxu0 0.0
        %1093 = vmatpush1.msra.mxu0 0.0
        %1094 = vmatprep.subr.mxu0 0.0
        %1095 = vmatpush1.msra.mxu0 0.0
        %1096 = vmatprep.subr.mxu0 0.0
        %1097 = vmatpush1.msra.mxu0 0.0
        %1098 = vmatprep.subr.mxu0 0.0
        %1099 = vmatpush1.msra.mxu0 0.0
        %1100 = vmatprep.subr.mxu0 0.0
        %1101 = vmatpush1.msra.mxu0 0.0
        %1102 = vmatprep.subr.mxu0 0.0
        %1103 = vmatpush1.msra.mxu0 0.0
        %1104 = vmatprep.subr.mxu0 0.0
        %1105 = vmatpush1.msra.mxu0 0.0
        %1106 = vmatprep.mubr.f32.mxu0 0.0
        %v1107 = vand.u32 %v923, 4294901760
        %1108 = vmatmul.mubr.f32.gmra.mrb[0].mxu0 %v1107
        %v1109 = vpop.f32.mrb[0].mxu0
        %v1110 = vadd.f32 %v1009, %v1109
        %v1111 = vpop.f32.mrb[0].mxu0
        %1112 = vmatprep.mubr.f32.mxu0 0.0
        %v1113 = vand.u32 %v926, 4294901760
        %1114 = vmatmul.mubr.f32.gmra.mrb[0].mxu0 %v1113
        %v1115 = vpop.f32.mrb[0].mxu0
        %v1116 = vadd.f32 %v1019, %v1115
        %v1117 = vpop.f32.mrb[0].mxu0
        %1118 = vmatprep.mubr.f32.mxu0 0.0
        %v1119 = vand.u32 %v929, 4294901760
        %1120 = vmatmul.mubr.f32.gmra.mrb[0].mxu0 %v1119
        %v1121 = vpop.f32.mrb[0].mxu0
        %v1122 = vadd.f32 %v1029, %v1121
        %v1123 = vpop.f32.mrb[0].mxu0
        %1124 = vdwg.mxu0
        %1125 = vmatprep.subr.mxu0 0.0
        %v1126 = vand.u32 %v898, 4294901760
        %v1127 = vsub.f32 %v898, %v1126
        %1128 = vmatpush1.msra.mxu0 %v1127
        %1129 = vmatprep.subr.mxu0 0.0
        %v1130 = vand.u32 %v933, 4294901760
        %v1131 = vsub.f32 %v933, %v1130
        %1132 = vmatpush1.msra.mxu0 %v1131
        %1133 = vmatprep.subr.mxu0 0.0
        %1134 = vmatpush1.msra.mxu0 0.0
        %1135 = vmatprep.subr.mxu0 0.0
        %1136 = vmatpush1.msra.mxu0 0.0
        %1137 = vmatprep.subr.mxu0 0.0
        %1138 = vmatpush1.msra.mxu0 0.0
        %1139 = vmatprep.subr.mxu0 0.0
        %1140 = vmatpush1.msra.mxu0 0.0
        %1141 = vmatprep.subr.mxu0 0.0
        %1142 = vmatpush1.msra.mxu0 0.0
        %1143 = vmatprep.subr.mxu0 0.0
        %1144 = vmatpush1.msra.mxu0 0.0
        %1145 = vmatprep.subr.mxu0 0.0
        %1146 = vmatpush1.msra.mxu0 0.0
        %1147 = vmatprep.subr.mxu0 0.0
        %1148 = vmatpush1.msra.mxu0 0.0
        %1149 = vmatprep.subr.mxu0 0.0
        %1150 = vmatpush1.msra.mxu0 0.0
        %1151 = vmatprep.subr.mxu0 0.0
        %1152 = vmatpush1.msra.mxu0 0.0
        %1153 = vmatprep.subr.mxu0 0.0
        %1154 = vmatpush1.msra.mxu0 0.0
        %1155 = vmatprep.subr.mxu0 0.0
        %1156 = vmatpush1.msra.mxu0 0.0
        %1157 = vmatprep.subr.mxu0 0.0
        %1158 = vmatpush1.msra.mxu0 0.0
        %1159 = vmatprep.subr.mxu0 0.0
        %1160 = vmatpush1.msra.mxu0 0.0
        %1161 = vmatprep.subr.mxu0 0.0
        %1162 = vmatpush1.msra.mxu0 0.0
        %1163 = vmatprep.subr.mxu0 0.0
        %1164 = vmatpush1.msra.mxu0 0.0
        %1165 = vmatprep.subr.mxu0 0.0
        %1166 = vmatpush1.msra.mxu0 0.0
        %1167 = vmatprep.subr.mxu0 0.0
        %1168 = vmatpush1.msra.mxu0 0.0
        %1169 = vmatprep.subr.mxu0 0.0
        %1170 = vmatpush1.msra.mxu0 0.0
        %1171 = vmatprep.subr.mxu0 0.0
        %1172 = vmatpush1.msra.mxu0 0.0
        %1173 = vmatprep.subr.mxu0 0.0
        %1174 = vmatpush1.msra.mxu0 0.0
        %1175 = vmatprep.subr.mxu0 0.0
        %1176 = vmatpush1.msra.mxu0 0.0
        %1177 = vmatprep.subr.mxu0 0.0
        %1178 = vmatpush1.msra.mxu0 0.0
        %1179 = vmatprep.subr.mxu0 0.0
        %1180 = vmatpush1.msra.mxu0 0.0
        %1181 = vmatprep.subr.mxu0 0.0
        %1182 = vmatpush1.msra.mxu0 0.0
        %1183 = vmatprep.subr.mxu0 0.0
        %1184 = vmatpush1.msra.mxu0 0.0
        %1185 = vmatprep.subr.mxu0 0.0
        %1186 = vmatpush1.msra.mxu0 0.0
        %1187 = vmatprep.subr.mxu0 0.0
        %1188 = vmatpush1.msra.mxu0 0.0
        %1189 = vmatprep.subr.mxu0 0.0
        %1190 = vmatpush1.msra.mxu0 0.0
        %1191 = vmatprep.subr.mxu0 0.0
        %1192 = vmatpush1.msra.mxu0 0.0
        %1193 = vmatprep.mubr.f32.mxu0 0.0
        %v1194 = vand.u32 %v923, 4294901760
        %v1195 = vsub.f32 %v923, %v1194
        %1196 = vmatmul.mubr.f32.gmra.mrb[0].mxu0 %v1195
        %v1197 = vpop.f32.mrb[0].mxu0
        %v1198 = vadd.f32 %v1110, %v1197
        %v1199 = vpop.f32.mrb[0].mxu0
        %1200 = vmatprep.mubr.f32.mxu0 0.0
        %v1201 = vand.u32 %v926, 4294901760
        %v1202 = vsub.f32 %v926, %v1201
        %1203 = vmatmul.mubr.f32.gmra.mrb[0].mxu0 %v1202
        %v1204 = vpop.f32.mrb[0].mxu0
        %v1205 = vadd.f32 %v1116, %v1204
        %v1206 = vpop.f32.mrb[0].mxu0
        %1207 = vmatprep.mubr.f32.mxu0 0.0
        %v1208 = vand.u32 %v929, 4294901760
        %v1209 = vsub.f32 %v929, %v1208
        %1210 = vmatmul.mubr.f32.gmra.mrb[0].mxu0 %v1209
        %v1211 = vpop.f32.mrb[0].mxu0
        %v1212 = vadd.f32 %v1122, %v1211
        %v1213 = vpop.f32.mrb[0].mxu0
        %1214 = vdwg.mxu0
        %1215 = vmatprep.subr.mxu0 0.0
        %v1216 = vand.u32 %v898, 4294901760
        %1217 = vmatpush1.msra.mxu0 %v1216
        %1218 = vmatprep.subr.mxu0 0.0
        %v1219 = vand.u32 %v933, 4294901760
        %1220 = vmatpush1.msra.mxu0 %v1219
        %1221 = vmatprep.subr.mxu0 0.0
        %1222 = vmatpush1.msra.mxu0 0.0
        %1223 = vmatprep.subr.mxu0 0.0
        %1224 = vmatpush1.msra.mxu0 0.0
        %1225 = vmatprep.subr.mxu0 0.0
        %1226 = vmatpush1.msra.mxu0 0.0
        %1227 = vmatprep.subr.mxu0 0.0
        %1228 = vmatpush1.msra.mxu0 0.0
        %1229 = vmatprep.subr.mxu0 0.0
        %1230 = vmatpush1.msra.mxu0 0.0
        %1231 = vmatprep.subr.mxu0 0.0
        %1232 = vmatpush1.msra.mxu0 0.0
        %1233 = vmatprep.subr.mxu0 0.0
        %1234 = vmatpush1.msra.mxu0 0.0
        %1235 = vmatprep.subr.mxu0 0.0
        %1236 = vmatpush1.msra.mxu0 0.0
        %1237 = vmatprep.subr.mxu0 0.0
        %1238 = vmatpush1.msra.mxu0 0.0
        %1239 = vmatprep.subr.mxu0 0.0
        %1240 = vmatpush1.msra.mxu0 0.0
        %1241 = vmatprep.subr.mxu0 0.0
        %1242 = vmatpush1.msra.mxu0 0.0
        %1243 = vmatprep.subr.mxu0 0.0
        %1244 = vmatpush1.msra.mxu0 0.0
        %1245 = vmatprep.subr.mxu0 0.0
        %1246 = vmatpush1.msra.mxu0 0.0
        %1247 = vmatprep.subr.mxu0 0.0
        %1248 = vmatpush1.msra.mxu0 0.0
        %1249 = vmatprep.subr.mxu0 0.0
        %1250 = vmatpush1.msra.mxu0 0.0
        %1251 = vmatprep.subr.mxu0 0.0
        %1252 = vmatpush1.msra.mxu0 0.0
        %1253 = vmatprep.subr.mxu0 0.0
        %1254 = vmatpush1.msra.mxu0 0.0
        %1255 = vmatprep.subr.mxu0 0.0
        %1256 = vmatpush1.msra.mxu0 0.0
        %1257 = vmatprep.subr.mxu0 0.0
        %1258 = vmatpush1.msra.mxu0 0.0
        %1259 = vmatprep.subr.mxu0 0.0
        %1260 = vmatpush1.msra.mxu0 0.0
        %1261 = vmatprep.subr.mxu0 0.0
        %1262 = vmatpush1.msra.mxu0 0.0
        %1263 = vmatprep.subr.mxu0 0.0
        %1264 = vmatpush1.msra.mxu0 0.0
        %1265 = vmatprep.subr.mxu0 0.0
        %1266 = vmatpush1.msra.mxu0 0.0
        %1267 = vmatprep.subr.mxu0 0.0
        %1268 = vmatpush1.msra.mxu0 0.0
        %1269 = vmatprep.subr.mxu0 0.0
        %1270 = vmatpush1.msra.mxu0 0.0
        %1271 = vmatprep.subr.mxu0 0.0
        %1272 = vmatpush1.msra.mxu0 0.0
        %1273 = vmatprep.subr.mxu0 0.0
        %1274 = vmatpush1.msra.mxu0 0.0
        %1275 = vmatprep.subr.mxu0 0.0
        %1276 = vmatpush1.msra.mxu0 0.0
        %1277 = vmatprep.subr.mxu0 0.0
        %1278 = vmatpush1.msra.mxu0 0.0
        %1279 = vmatprep.subr.mxu0 0.0
        %1280 = vmatpush1.msra.mxu0 0.0
        %1281 = vmatprep.mubr.f32.mxu0 0.0
        %v1282 = vand.u32 %v923, 4294901760
        %v1283 = vsub.f32 %v923, %v1282
        %v1284 = vand.u32 %v1283, 4294901760
        %1285 = vmatmul.mubr.f32.gmra.mrb[0].mxu0 %v1284
        %v1286 = vpop.f32.mrb[0].mxu0
        %v1287 = vadd.f32 %v1198, %v1286
        %v1288 = vpop.f32.mrb[0].mxu0
        %1289 = vmatprep.mubr.f32.mxu0 0.0
        %v1290 = vand.u32 %v926, 4294901760
        %v1291 = vsub.f32 %v926, %v1290
        %v1292 = vand.u32 %v1291, 4294901760
        %1293 = vmatmul.mubr.f32.gmra.mrb[0].mxu0 %v1292
        %v1294 = vpop.f32.mrb[0].mxu0
        %v1295 = vadd.f32 %v1205, %v1294
        %v1296 = vpop.f32.mrb[0].mxu0
        %1297 = vmatprep.mubr.f32.mxu0 0.0
        %v1298 = vand.u32 %v929, 4294901760
        %v1299 = vsub.f32 %v929, %v1298
        %v1300 = vand.u32 %v1299, 4294901760
        %1301 = vmatmul.mubr.f32.gmra.mrb[0].mxu0 %v1300
        %v1302 = vpop.f32.mrb[0].mxu0
        %v1303 = vadd.f32 %v1212, %v1302
        %v1304 = vpop.f32.mrb[0].mxu0
        %1305 = vdwg.mxu0
        %1306 = vmatprep.subr.mxu0 0.0
        %v1307 = vand.u32 %v898, 4294901760
        %v1308 = vsub.f32 %v898, %v1307
        %v1309 = vand.u32 %v1308, 4294901760
        %1310 = vmatpush1.msra.mxu0 %v1309
        %1311 = vmatprep.subr.mxu0 0.0
        %v1312 = vand.u32 %v933, 4294901760
        %v1313 = vsub.f32 %v933, %v1312
        %v1314 = vand.u32 %v1313, 4294901760
        %1315 = vmatpush1.msra.mxu0 %v1314
        %1316 = vmatprep.subr.mxu0 0.0
        %1317 = vmatpush1.msra.mxu0 0.0
        %1318 = vmatprep.subr.mxu0 0.0
        %1319 = vmatpush1.msra.mxu0 0.0
        %1320 = vmatprep.subr.mxu0 0.0
        %1321 = vmatpush1.msra.mxu0 0.0
        %1322 = vmatprep.subr.mxu0 0.0
        %1323 = vmatpush1.msra.mxu0 0.0
        %1324 = vmatprep.subr.mxu0 0.0
        %1325 = vmatpush1.msra.mxu0 0.0
        %1326 = vmatprep.subr.mxu0 0.0
        %1327 = vmatpush1.msra.mxu0 0.0
        %1328 = vmatprep.subr.mxu0 0.0
        %1329 = vmatpush1.msra.mxu0 0.0
        %1330 = vmatprep.subr.mxu0 0.0
        %1331 = vmatpush1.msra.mxu0 0.0
        %1332 = vmatprep.subr.mxu0 0.0
        %1333 = vmatpush1.msra.mxu0 0.0
        %1334 = vmatprep.subr.mxu0 0.0
        %1335 = vmatpush1.msra.mxu0 0.0
        %1336 = vmatprep.subr.mxu0 0.0
        %1337 = vmatpush1.msra.mxu0 0.0
        %1338 = vmatprep.subr.mxu0 0.0
        %1339 = vmatpush1.msra.mxu0 0.0
        %1340 = vmatprep.subr.mxu0 0.0
        %1341 = vmatpush1.msra.mxu0 0.0
        %1342 = vmatprep.subr.mxu0 0.0
        %1343 = vmatpush1.msra.mxu0 0.0
        %1344 = vmatprep.subr.mxu0 0.0
        %1345 = vmatpush1.msra.mxu0 0.0
        %1346 = vmatprep.subr.mxu0 0.0
        %1347 = vmatpush1.msra.mxu0 0.0
        %1348 = vmatprep.subr.mxu0 0.0
        %1349 = vmatpush1.msra.mxu0 0.0
        %1350 = vmatprep.subr.mxu0 0.0
        %1351 = vmatpush1.msra.mxu0 0.0
        %1352 = vmatprep.subr.mxu0 0.0
        %1353 = vmatpush1.msra.mxu0 0.0
        %1354 = vmatprep.subr.mxu0 0.0
        %1355 = vmatpush1.msra.mxu0 0.0
        %1356 = vmatprep.subr.mxu0 0.0
        %1357 = vmatpush1.msra.mxu0 0.0
        %1358 = vmatprep.subr.mxu0 0.0
        %1359 = vmatpush1.msra.mxu0 0.0
        %1360 = vmatprep.subr.mxu0 0.0
        %1361 = vmatpush1.msra.mxu0 0.0
        %1362 = vmatprep.subr.mxu0 0.0
        %1363 = vmatpush1.msra.mxu0 0.0
        %1364 = vmatprep.subr.mxu0 0.0
        %1365 = vmatpush1.msra.mxu0 0.0
        %1366 = vmatprep.subr.mxu0 0.0
        %1367 = vmatpush1.msra.mxu0 0.0
        %1368 = vmatprep.subr.mxu0 0.0
        %1369 = vmatpush1.msra.mxu0 0.0
        %1370 = vmatprep.subr.mxu0 0.0
        %1371 = vmatpush1.msra.mxu0 0.0
        %1372 = vmatprep.subr.mxu0 0.0
        %1373 = vmatpush1.msra.mxu0 0.0
        %1374 = vmatprep.subr.mxu0 0.0
        %1375 = vmatpush1.msra.mxu0 0.0
        %1376 = vmatprep.mubr.f32.mxu0 0.0
        %v1377 = vand.u32 %v923, 4294901760
        %1378 = vmatmul.mubr.f32.gmra.mrb[0].mxu0 %v1377
        %v1379 = vpop.f32.mrb[0].mxu0
        %v1380 = vadd.f32 %v1287, %v1379
        %v1381 = vpop.f32.mrb[0].mxu0
        %1382 = vmatprep.mubr.f32.mxu0 0.0
        %v1383 = vand.u32 %v926, 4294901760
        %1384 = vmatmul.mubr.f32.gmra.mrb[0].mxu0 %v1383
        %v1385 = vpop.f32.mrb[0].mxu0
        %v1386 = vadd.f32 %v1295, %v1385
        %v1387 = vpop.f32.mrb[0].mxu0
        %1388 = vmatprep.mubr.f32.mxu0 0.0
        %v1389 = vand.u32 %v929, 4294901760
        %1390 = vmatmul.mubr.f32.gmra.mrb[0].mxu0 %v1389
        %v1391 = vpop.f32.mrb[0].mxu0
        %v1392 = vadd.f32 %v1303, %v1391
        %v1393 = vpop.f32.mrb[0].mxu0
        %1394 = vdwg.mxu0
        %1395 = vmatprep.subr.mxu0 0.0
        %v1396 = vand.u32 %v898, 4294901760
        %1397 = vmatpush1.msra.mxu0 %v1396
        %1398 = vmatprep.subr.mxu0 0.0
        %v1399 = vand.u32 %v933, 4294901760
        %1400 = vmatpush1.msra.mxu0 %v1399
        %1401 = vmatprep.subr.mxu0 0.0
        %1402 = vmatpush1.msra.mxu0 0.0
        %1403 = vmatprep.subr.mxu0 0.0
        %1404 = vmatpush1.msra.mxu0 0.0
        %1405 = vmatprep.subr.mxu0 0.0
        %1406 = vmatpush1.msra.mxu0 0.0
        %1407 = vmatprep.subr.mxu0 0.0
        %1408 = vmatpush1.msra.mxu0 0.0
        %1409 = vmatprep.subr.mxu0 0.0
        %1410 = vmatpush1.msra.mxu0 0.0
        %1411 = vmatprep.subr.mxu0 0.0
        %1412 = vmatpush1.msra.mxu0 0.0
        %1413 = vmatprep.subr.mxu0 0.0
        %1414 = vmatpush1.msra.mxu0 0.0
        %1415 = vmatprep.subr.mxu0 0.0
        %1416 = vmatpush1.msra.mxu0 0.0
        %1417 = vmatprep.subr.mxu0 0.0
        %1418 = vmatpush1.msra.mxu0 0.0
        %1419 = vmatprep.subr.mxu0 0.0
        %1420 = vmatpush1.msra.mxu0 0.0
        %1421 = vmatprep.subr.mxu0 0.0
        %1422 = vmatpush1.msra.mxu0 0.0
        %1423 = vmatprep.subr.mxu0 0.0
        %1424 = vmatpush1.msra.mxu0 0.0
        %1425 = vmatprep.subr.mxu0 0.0
        %1426 = vmatpush1.msra.mxu0 0.0
        %1427 = vmatprep.subr.mxu0 0.0
        %1428 = vmatpush1.msra.mxu0 0.0
        %1429 = vmatprep.subr.mxu0 0.0
        %1430 = vmatpush1.msra.mxu0 0.0
        %1431 = vmatprep.subr.mxu0 0.0
        %1432 = vmatpush1.msra.mxu0 0.0
        %1433 = vmatprep.subr.mxu0 0.0
        %1434 = vmatpush1.msra.mxu0 0.0
        %1435 = vmatprep.subr.mxu0 0.0
        %1436 = vmatpush1.msra.mxu0 0.0
        %1437 = vmatprep.subr.mxu0 0.0
        %1438 = vmatpush1.msra.mxu0 0.0
        %1439 = vmatprep.subr.mxu0 0.0
        %1440 = vmatpush1.msra.mxu0 0.0
        %1441 = vmatprep.subr.mxu0 0.0
        %1442 = vmatpush1.msra.mxu0 0.0
        %1443 = vmatprep.subr.mxu0 0.0
        %1444 = vmatpush1.msra.mxu0 0.0
        %1445 = vmatprep.subr.mxu0 0.0
        %1446 = vmatpush1.msra.mxu0 0.0
        %1447 = vmatprep.subr.mxu0 0.0
        %1448 = vmatpush1.msra.mxu0 0.0
        %1449 = vmatprep.subr.mxu0 0.0
        %1450 = vmatpush1.msra.mxu0 0.0
        %1451 = vmatprep.subr.mxu0 0.0
        %1452 = vmatpush1.msra.mxu0 0.0
        %1453 = vmatprep.subr.mxu0 0.0
        %1454 = vmatpush1.msra.mxu0 0.0
        %1455 = vmatprep.subr.mxu0 0.0
        %1456 = vmatpush1.msra.mxu0 0.0
        %1457 = vmatprep.subr.mxu0 0.0
        %1458 = vmatpush1.msra.mxu0 0.0
        %1459 = vmatprep.subr.mxu0 0.0
        %1460 = vmatpush1.msra.mxu0 0.0
        %1461 = vmatprep.mubr.f32.mxu0 0.0
        %v1462 = vand.u32 %v923, 4294901760
        %1463 = vmatmul.mubr.f32.gmra.mrb[0].mxu0 %v1462
        %v1464 = vpop.f32.mrb[0].mxu0
        %v1465 = vadd.f32 %v1380, %v1464
        %v1466 = vpop.f32.mrb[0].mxu0
        %1467 = vmatprep.mubr.f32.mxu0 0.0
        %v1468 = vand.u32 %v926, 4294901760
        %1469 = vmatmul.mubr.f32.gmra.mrb[0].mxu0 %v1468
        %v1470 = vpop.f32.mrb[0].mxu0
        %v1471 = vadd.f32 %v1386, %v1470
        %v1472 = vpop.f32.mrb[0].mxu0
        %1473 = vmatprep.mubr.f32.mxu0 0.0
        %v1474 = vand.u32 %v929, 4294901760
        %1475 = vmatmul.mubr.f32.gmra.mrb[0].mxu0 %v1474
        %v1476 = vpop.f32.mrb[0].mxu0
        %v1477 = vadd.f32 %v1392, %v1476
        %v1478 = vpop.f32.mrb[0].mxu0
        %1479 = vdwg.mxu0
        %v1480 = vmax.f32 %v1465, 0.0
        %v1481 = vmax.f32 %v1471, 0.0
        %v1482 = vmax.f32 %v1477, 0.0
        %v1483 = vld [vmem:[%s5] sm:$0xff]
        %v1484 = vld [vmem:[%s5 + $0x8] sm:$0x3]
        %v1485 = vld [vmem:[%s6] sm:$0xff]
        %v1486 = vld [vmem:[%s6 + $0x8] sm:$0x3]
        %1488 = vset.pattern.permute.xlu0 0
        %1489 = vperm.xlu0 %1488, %v1485
        %v1490 = vpop.permute.xlu0 %1489
        %1493 = vset.pattern.permute.xlu0 0
        %1494 = vperm.xlu0 %1493, %v1486
        %v1495 = vpop.permute.xlu0 %1494
        %vm1497 = vcmask 162816
        %v1499 = vsel %vm1497, %v1483, 0
        %v1502 = vsel %vm1497, %v1484, 0
        %vm1504 = vcmask 1043456
        %v1506 = vsel %vm1504, %v1482, 0
        %1508 = vmatprep.subr.mxu0 0.0
        %v1509 = vand.u32 %v1480, 4294901760
        %1510 = vmatpush1.msra.mxu0 %v1509
        %1511 = vmatprep.subr.mxu0 0.0
        %v1512 = vand.u32 %v1481, 4294901760
        %1513 = vmatpush1.msra.mxu0 %v1512
        %1514 = vmatprep.subr.mxu0 0.0
        %v1515 = vand.u32 %v1506, 4294901760
        %1516 = vmatpush1.msra.mxu0 %v1515
        %1517 = vmatprep.subr.mxu0 0.0
        %1518 = vmatpush1.msra.mxu0 0.0
        %1519 = vmatprep.subr.mxu0 0.0
        %1520 = vmatpush1.msra.mxu0 0.0
        %1521 = vmatprep.subr.mxu0 0.0
        %1522 = vmatpush1.msra.mxu0 0.0
        %1523 = vmatprep.subr.mxu0 0.0
        %1524 = vmatpush1.msra.mxu0 0.0
        %1525 = vmatprep.subr.mxu0 0.0
        %1526 = vmatpush1.msra.mxu0 0.0
        %1527 = vmatprep.subr.mxu0 0.0
        %1528 = vmatpush1.msra.mxu0 0.0
        %1529 = vmatprep.subr.mxu0 0.0
        %1530 = vmatpush1.msra.mxu0 0.0
        %1531 = vmatprep.subr.mxu0 0.0
        %1532 = vmatpush1.msra.mxu0 0.0
        %1533 = vmatprep.subr.mxu0 0.0
        %1534 = vmatpush1.msra.mxu0 0.0
        %1535 = vmatprep.subr.mxu0 0.0
        %1536 = vmatpush1.msra.mxu0 0.0
        %1537 = vmatprep.subr.mxu0 0.0
        %1538 = vmatpush1.msra.mxu0 0.0
        %1539 = vmatprep.subr.mxu0 0.0
        %1540 = vmatpush1.msra.mxu0 0.0
        %1541 = vmatprep.subr.mxu0 0.0
        %1542 = vmatpush1.msra.mxu0 0.0
        %1543 = vmatprep.subr.mxu0 0.0
        %1544 = vmatpush1.msra.mxu0 0.0
        %1545 = vmatprep.subr.mxu0 0.0
        %1546 = vmatpush1.msra.mxu0 0.0
        %1547 = vmatprep.subr.mxu0 0.0
        %1548 = vmatpush1.msra.mxu0 0.0
        %1549 = vmatprep.subr.mxu0 0.0
        %1550 = vmatpush1.msra.mxu0 0.0
        %1551 = vmatprep.subr.mxu0 0.0
        %1552 = vmatpush1.msra.mxu0 0.0
        %1553 = vmatprep.subr.mxu0 0.0
        %1554 = vmatpush1.msra.mxu0 0.0
        %1555 = vmatprep.subr.mxu0 0.0
        %1556 = vmatpush1.msra.mxu0 0.0
        %1557 = vmatprep.subr.mxu0 0.0
        %1558 = vmatpush1.msra.mxu0 0.0
        %1559 = vmatprep.subr.mxu0 0.0
        %1560 = vmatpush1.msra.mxu0 0.0
        %1561 = vmatprep.subr.mxu0 0.0
        %1562 = vmatpush1.msra.mxu0 0.0
        %1563 = vmatprep.subr.mxu0 0.0
        %1564 = vmatpush1.msra.mxu0 0.0
        %1565 = vmatprep.subr.mxu0 0.0
        %1566 = vmatpush1.msra.mxu0 0.0
        %1567 = vmatprep.subr.mxu0 0.0
        %1568 = vmatpush1.msra.mxu0 0.0
        %1569 = vmatprep.subr.mxu0 0.0
        %1570 = vmatpush1.msra.mxu0 0.0
        %1571 = vmatprep.subr.mxu0 0.0
        %1572 = vmatpush1.msra.mxu0 0.0
        %1573 = vmatprep.subr.mxu0 0.0
        %1574 = vmatpush1.msra.mxu0 0.0
        %1575 = vmatprep.mubr.f32.mxu0 0.0
        %v1576 = vand.u32 %v1499, 4294901760
        %v1577 = vsub.f32 %v1499, %v1576
        %v1578 = vand.u32 %v1577, 4294901760
        %v1579 = vsub.f32 %v1577, %v1578
        %v1580 = vand.u32 %v1579, 4294901760
        %1581 = vmatmul.mubr.f32.gmra.mrb[0].mxu0 %v1580
        %v1582 = vpop.f32.mrb[0].mxu0
        %v1583 = vadd.f32 %v1490, %v1582
        %v1584 = vpop.f32.mrb[0].mxu0
        %1585 = vmatprep.mubr.f32.mxu0 0.0
        %v1586 = vand.u32 %v1502, 4294901760
        %v1587 = vsub.f32 %v1502, %v1586
        %v1588 = vand.u32 %v1587, 4294901760
        %v1589 = vsub.f32 %v1587, %v1588
        %v1590 = vand.u32 %v1589, 4294901760
        %1591 = vmatmul.mubr.f32.gmra.mrb[0].mxu0 %v1590
        %v1592 = vpop.f32.mrb[0].mxu0
        %v1593 = vadd.f32 %v1495, %v1592
        %v1594 = vpop.f32.mrb[0].mxu0
        %1595 = vdwg.mxu0
        %1596 = vmatprep.subr.mxu0 0.0
        %v1597 = vand.u32 %v1480, 4294901760
        %v1598 = vsub.f32 %v1480, %v1597
        %v1599 = vand.u32 %v1598, 4294901760
        %v1600 = vsub.f32 %v1598, %v1599
        %v1601 = vand.u32 %v1600, 4294901760
        %1602 = vmatpush1.msra.mxu0 %v1601
        %1603 = vmatprep.subr.mxu0 0.0
        %v1604 = vand.u32 %v1481, 4294901760
        %v1605 = vsub.f32 %v1481, %v1604
        %v1606 = vand.u32 %v1605, 4294901760
        %v1607 = vsub.f32 %v1605, %v1606
        %v1608 = vand.u32 %v1607, 4294901760
        %1609 = vmatpush1.msra.mxu0 %v1608
        %1610 = vmatprep.subr.mxu0 0.0
        %v1611 = vand.u32 %v1506, 4294901760
        %v1612 = vsub.f32 %v1506, %v1611
        %v1613 = vand.u32 %v1612, 4294901760
        %v1614 = vsub.f32 %v1612, %v1613
        %v1615 = vand.u32 %v1614, 4294901760
        %1616 = vmatpush1.msra.mxu0 %v1615
        %1617 = vmatprep.subr.mxu0 0.0
        %1618 = vmatpush1.msra.mxu0 0.0
        %1619 = vmatprep.subr.mxu0 0.0
        %1620 = vmatpush1.msra.mxu0 0.0
        %1621 = vmatprep.subr.mxu0 0.0
        %1622 = vmatpush1.msra.mxu0 0.0
        %1623 = vmatprep.subr.mxu0 0.0
        %1624 = vmatpush1.msra.mxu0 0.0
        %1625 = vmatprep.subr.mxu0 0.0
        %1626 = vmatpush1.msra.mxu0 0.0
        %1627 = vmatprep.subr.mxu0 0.0
        %1628 = vmatpush1.msra.mxu0 0.0
        %1629 = vmatprep.subr.mxu0 0.0
        %1630 = vmatpush1.msra.mxu0 0.0
        %1631 = vmatprep.subr.mxu0 0.0
        %1632 = vmatpush1.msra.mxu0 0.0
        %1633 = vmatprep.subr.mxu0 0.0
        %1634 = vmatpush1.msra.mxu0 0.0
        %1635 = vmatprep.subr.mxu0 0.0
        %1636 = vmatpush1.msra.mxu0 0.0
        %1637 = vmatprep.subr.mxu0 0.0
        %1638 = vmatpush1.msra.mxu0 0.0
        %1639 = vmatprep.subr.mxu0 0.0
        %1640 = vmatpush1.msra.mxu0 0.0
        %1641 = vmatprep.subr.mxu0 0.0
        %1642 = vmatpush1.msra.mxu0 0.0
        %1643 = vmatprep.subr.mxu0 0.0
        %1644 = vmatpush1.msra.mxu0 0.0
        %1645 = vmatprep.subr.mxu0 0.0
        %1646 = vmatpush1.msra.mxu0 0.0
        %1647 = vmatprep.subr.mxu0 0.0
        %1648 = vmatpush1.msra.mxu0 0.0
        %1649 = vmatprep.subr.mxu0 0.0
        %1650 = vmatpush1.msra.mxu0 0.0
        %1651 = vmatprep.subr.mxu0 0.0
        %1652 = vmatpush1.msra.mxu0 0.0
        %1653 = vmatprep.subr.mxu0 0.0
        %1654 = vmatpush1.msra.mxu0 0.0
        %1655 = vmatprep.subr.mxu0 0.0
        %1656 = vmatpush1.msra.mxu0 0.0
        %1657 = vmatprep.subr.mxu0 0.0
        %1658 = vmatpush1.msra.mxu0 0.0
        %1659 = vmatprep.subr.mxu0 0.0
        %1660 = vmatpush1.msra.mxu0 0.0
        %1661 = vmatprep.subr.mxu0 0.0
        %1662 = vmatpush1.msra.mxu0 0.0
        %1663 = vmatprep.subr.mxu0 0.0
        %1664 = vmatpush1.msra.mxu0 0.0
        %1665 = vmatprep.subr.mxu0 0.0
        %1666 = vmatpush1.msra.mxu0 0.0
        %1667 = vmatprep.subr.mxu0 0.0
        %1668 = vmatpush1.msra.mxu0 0.0
        %1669 = vmatprep.subr.mxu0 0.0
        %1670 = vmatpush1.msra.mxu0 0.0
        %1671 = vmatprep.subr.mxu0 0.0
        %1672 = vmatpush1.msra.mxu0 0.0
        %1673 = vmatprep.subr.mxu0 0.0
        %1674 = vmatpush1.msra.mxu0 0.0
        %1675 = vmatprep.mubr.f32.mxu0 0.0
        %v1676 = vand.u32 %v1499, 4294901760
        %1677 = vmatmul.mubr.f32.gmra.mrb[0].mxu0 %v1676
        %v1678 = vpop.f32.mrb[0].mxu0
        %v1679 = vadd.f32 %v1583, %v1678
        %v1680 = vpop.f32.mrb[0].mxu0
        %1681 = vmatprep.mubr.f32.mxu0 0.0
        %v1682 = vand.u32 %v1502, 4294901760
        %1683 = vmatmul.mubr.f32.gmra.mrb[0].mxu0 %v1682
        %v1684 = vpop.f32.mrb[0].mxu0
        %v1685 = vadd.f32 %v1593, %v1684
        %v1686 = vpop.f32.mrb[0].mxu0
        %1687 = vdwg.mxu0
        %1688 = vmatprep.subr.mxu0 0.0
        %v1689 = vand.u32 %v1480, 4294901760
        %v1690 = vsub.f32 %v1480, %v1689
        %1691 = vmatpush1.msra.mxu0 %v1690
        %1692 = vmatprep.subr.mxu0 0.0
        %v1693 = vand.u32 %v1481, 4294901760
        %v1694 = vsub.f32 %v1481, %v1693
        %1695 = vmatpush1.msra.mxu0 %v1694
        %1696 = vmatprep.subr.mxu0 0.0
        %v1697 = vand.u32 %v1506, 4294901760
        %v1698 = vsub.f32 %v1506, %v1697
        %1699 = vmatpush1.msra.mxu0 %v1698
        %1700 = vmatprep.subr.mxu0 0.0
        %1701 = vmatpush1.msra.mxu0 0.0
        %1702 = vmatprep.subr.mxu0 0.0
        %1703 = vmatpush1.msra.mxu0 0.0
        %1704 = vmatprep.subr.mxu0 0.0
        %1705 = vmatpush1.msra.mxu0 0.0
        %1706 = vmatprep.subr.mxu0 0.0
        %1707 = vmatpush1.msra.mxu0 0.0
        %1708 = vmatprep.subr.mxu0 0.0
        %1709 = vmatpush1.msra.mxu0 0.0
        %1710 = vmatprep.subr.mxu0 0.0
        %1711 = vmatpush1.msra.mxu0 0.0
        %1712 = vmatprep.subr.mxu0 0.0
        %1713 = vmatpush1.msra.mxu0 0.0
        %1714 = vmatprep.subr.mxu0 0.0
        %1715 = vmatpush1.msra.mxu0 0.0
        %1716 = vmatprep.subr.mxu0 0.0
        %1717 = vmatpush1.msra.mxu0 0.0
        %1718 = vmatprep.subr.mxu0 0.0
        %1719 = vmatpush1.msra.mxu0 0.0
        %1720 = vmatprep.subr.mxu0 0.0
        %1721 = vmatpush1.msra.mxu0 0.0
        %1722 = vmatprep.subr.mxu0 0.0
        %1723 = vmatpush1.msra.mxu0 0.0
        %1724 = vmatprep.subr.mxu0 0.0
        %1725 = vmatpush1.msra.mxu0 0.0
        %1726 = vmatprep.subr.mxu0 0.0
        %1727 = vmatpush1.msra.mxu0 0.0
        %1728 = vmatprep.subr.mxu0 0.0
        %1729 = vmatpush1.msra.mxu0 0.0
        %1730 = vmatprep.subr.mxu0 0.0
        %1731 = vmatpush1.msra.mxu0 0.0
        %1732 = vmatprep.subr.mxu0 0.0
        %1733 = vmatpush1.msra.mxu0 0.0
        %1734 = vmatprep.subr.mxu0 0.0
        %1735 = vmatpush1.msra.mxu0 0.0
        %1736 = vmatprep.subr.mxu0 0.0
        %1737 = vmatpush1.msra.mxu0 0.0
        %1738 = vmatprep.subr.mxu0 0.0
        %1739 = vmatpush1.msra.mxu0 0.0
        %1740 = vmatprep.subr.mxu0 0.0
        %1741 = vmatpush1.msra.mxu0 0.0
        %1742 = vmatprep.subr.mxu0 0.0
        %1743 = vmatpush1.msra.mxu0 0.0
        %1744 = vmatprep.subr.mxu0 0.0
        %1745 = vmatpush1.msra.mxu0 0.0
        %1746 = vmatprep.subr.mxu0 0.0
        %1747 = vmatpush1.msra.mxu0 0.0
        %1748 = vmatprep.subr.mxu0 0.0
        %1749 = vmatpush1.msra.mxu0 0.0
        %1750 = vmatprep.subr.mxu0 0.0
        %1751 = vmatpush1.msra.mxu0 0.0
        %1752 = vmatprep.subr.mxu0 0.0
        %1753 = vmatpush1.msra.mxu0 0.0
        %1754 = vmatprep.subr.mxu0 0.0
        %1755 = vmatpush1.msra.mxu0 0.0
        %1756 = vmatprep.subr.mxu0 0.0
        %1757 = vmatpush1.msra.mxu0 0.0
        %1758 = vmatprep.mubr.f32.mxu0 0.0
        %v1759 = vand.u32 %v1499, 4294901760
        %v1760 = vsub.f32 %v1499, %v1759
        %1761 = vmatmul.mubr.f32.gmra.mrb[0].mxu0 %v1760
        %v1762 = vpop.f32.mrb[0].mxu0
        %v1763 = vadd.f32 %v1679, %v1762
        %v1764 = vpop.f32.mrb[0].mxu0
        %1765 = vmatprep.mubr.f32.mxu0 0.0
        %v1766 = vand.u32 %v1502, 4294901760
        %v1767 = vsub.f32 %v1502, %v1766
        %1768 = vmatmul.mubr.f32.gmra.mrb[0].mxu0 %v1767
        %v1769 = vpop.f32.mrb[0].mxu0
        %v1770 = vadd.f32 %v1685, %v1769
        %v1771 = vpop.f32.mrb[0].mxu0
        %1772 = vdwg.mxu0
        %1773 = vmatprep.subr.mxu0 0.0
        %v1774 = vand.u32 %v1480, 4294901760
        %1775 = vmatpush1.msra.mxu0 %v1774
        %1776 = vmatprep.subr.mxu0 0.0
        %v1777 = vand.u32 %v1481, 4294901760
        %1778 = vmatpush1.msra.mxu0 %v1777
        %1779 = vmatprep.subr.mxu0 0.0
        %v1780 = vand.u32 %v1506, 4294901760
        %1781 = vmatpush1.msra.mxu0 %v1780
        %1782 = vmatprep.subr.mxu0 0.0
        %1783 = vmatpush1.msra.mxu0 0.0
        %1784 = vmatprep.subr.mxu0 0.0
        %1785 = vmatpush1.msra.mxu0 0.0
        %1786 = vmatprep.subr.mxu0 0.0
        %1787 = vmatpush1.msra.mxu0 0.0
        %1788 = vmatprep.subr.mxu0 0.0
        %1789 = vmatpush1.msra.mxu0 0.0
        %1790 = vmatprep.subr.mxu0 0.0
        %1791 = vmatpush1.msra.mxu0 0.0
        %1792 = vmatprep.subr.mxu0 0.0
        %1793 = vmatpush1.msra.mxu0 0.0
        %1794 = vmatprep.subr.mxu0 0.0
        %1795 = vmatpush1.msra.mxu0 0.0
        %1796 = vmatprep.subr.mxu0 0.0
        %1797 = vmatpush1.msra.mxu0 0.0
        %1798 = vmatprep.subr.mxu0 0.0
        %1799 = vmatpush1.msra.mxu0 0.0
        %1800 = vmatprep.subr.mxu0 0.0
        %1801 = vmatpush1.msra.mxu0 0.0
        %1802 = vmatprep.subr.mxu0 0.0
        %1803 = vmatpush1.msra.mxu0 0.0
        %1804 = vmatprep.subr.mxu0 0.0
        %1805 = vmatpush1.msra.mxu0 0.0
        %1806 = vmatprep.subr.mxu0 0.0
        %1807 = vmatpush1.msra.mxu0 0.0
        %1808 = vmatprep.subr.mxu0 0.0
        %1809 = vmatpush1.msra.mxu0 0.0
        %1810 = vmatprep.subr.mxu0 0.0
        %1811 = vmatpush1.msra.mxu0 0.0
        %1812 = vmatprep.subr.mxu0 0.0
        %1813 = vmatpush1.msra.mxu0 0.0
        %1814 = vmatprep.subr.mxu0 0.0
        %1815 = vmatpush1.msra.mxu0 0.0
        %1816 = vmatprep.subr.mxu0 0.0
        %1817 = vmatpush1.msra.mxu0 0.0
        %1818 = vmatprep.subr.mxu0 0.0
        %1819 = vmatpush1.msra.mxu0 0.0
        %1820 = vmatprep.subr.mxu0 0.0
        %1821 = vmatpush1.msra.mxu0 0.0
        %1822 = vmatprep.subr.mxu0 0.0
        %1823 = vmatpush1.msra.mxu0 0.0
        %1824 = vmatprep.subr.mxu0 0.0
        %1825 = vmatpush1.msra.mxu0 0.0
        %1826 = vmatprep.subr.mxu0 0.0
        %1827 = vmatpush1.msra.mxu0 0.0
        %1828 = vmatprep.subr.mxu0 0.0
        %1829 = vmatpush1.msra.mxu0 0.0
        %1830 = vmatprep.subr.mxu0 0.0
        %1831 = vmatpush1.msra.mxu0 0.0
        %1832 = vmatprep.subr.mxu0 0.0
        %1833 = vmatpush1.msra.mxu0 0.0
        %1834 = vmatprep.subr.mxu0 0.0
        %1835 = vmatpush1.msra.mxu0 0.0
        %1836 = vmatprep.subr.mxu0 0.0
        %1837 = vmatpush1.msra.mxu0 0.0
        %1838 = vmatprep.subr.mxu0 0.0
        %1839 = vmatpush1.msra.mxu0 0.0
        %1840 = vmatprep.mubr.f32.mxu0 0.0
        %v1841 = vand.u32 %v1499, 4294901760
        %v1842 = vsub.f32 %v1499, %v1841
        %v1843 = vand.u32 %v1842, 4294901760
        %1844 = vmatmul.mubr.f32.gmra.mrb[0].mxu0 %v1843
        %v1845 = vpop.f32.mrb[0].mxu0
        %v1846 = vadd.f32 %v1763, %v1845
        %v1847 = vpop.f32.mrb[0].mxu0
        %1848 = vmatprep.mubr.f32.mxu0 0.0
        %v1849 = vand.u32 %v1502, 4294901760
        %v1850 = vsub.f32 %v1502, %v1849
        %v1851 = vand.u32 %v1850, 4294901760
        %1852 = vmatmul.mubr.f32.gmra.mrb[0].mxu0 %v1851
        %v1853 = vpop.f32.mrb[0].mxu0
        %v1854 = vadd.f32 %v1770, %v1853
        %v1855 = vpop.f32.mrb[0].mxu0
        %1856 = vdwg.mxu0
        %1857 = vmatprep.subr.mxu0 0.0
        %v1858 = vand.u32 %v1480, 4294901760
        %v1859 = vsub.f32 %v1480, %v1858
        %v1860 = vand.u32 %v1859, 4294901760
        %1861 = vmatpush1.msra.mxu0 %v1860
        %1862 = vmatprep.subr.mxu0 0.0
        %v1863 = vand.u32 %v1481, 4294901760
        %v1864 = vsub.f32 %v1481, %v1863
        %v1865 = vand.u32 %v1864, 4294901760
        %1866 = vmatpush1.msra.mxu0 %v1865
        %1867 = vmatprep.subr.mxu0 0.0
        %v1868 = vand.u32 %v1506, 4294901760
        %v1869 = vsub.f32 %v1506, %v1868
        %v1870 = vand.u32 %v1869, 4294901760
        %1871 = vmatpush1.msra.mxu0 %v1870
        %1872 = vmatprep.subr.mxu0 0.0
        %1873 = vmatpush1.msra.mxu0 0.0
        %1874 = vmatprep.subr.mxu0 0.0
        %1875 = vmatpush1.msra.mxu0 0.0
        %1876 = vmatprep.subr.mxu0 0.0
        %1877 = vmatpush1.msra.mxu0 0.0
        %1878 = vmatprep.subr.mxu0 0.0
        %1879 = vmatpush1.msra.mxu0 0.0
        %1880 = vmatprep.subr.mxu0 0.0
        %1881 = vmatpush1.msra.mxu0 0.0
        %1882 = vmatprep.subr.mxu0 0.0
        %1883 = vmatpush1.msra.mxu0 0.0
        %1884 = vmatprep.subr.mxu0 0.0
        %1885 = vmatpush1.msra.mxu0 0.0
        %1886 = vmatprep.subr.mxu0 0.0
        %1887 = vmatpush1.msra.mxu0 0.0
        %1888 = vmatprep.subr.mxu0 0.0
        %1889 = vmatpush1.msra.mxu0 0.0
        %1890 = vmatprep.subr.mxu0 0.0
        %1891 = vmatpush1.msra.mxu0 0.0
        %1892 = vmatprep.subr.mxu0 0.0
        %1893 = vmatpush1.msra.mxu0 0.0
        %1894 = vmatprep.subr.mxu0 0.0
        %1895 = vmatpush1.msra.mxu0 0.0
        %1896 = vmatprep.subr.mxu0 0.0
        %1897 = vmatpush1.msra.mxu0 0.0
        %1898 = vmatprep.subr.mxu0 0.0
        %1899 = vmatpush1.msra.mxu0 0.0
        %1900 = vmatprep.subr.mxu0 0.0
        %1901 = vmatpush1.msra.mxu0 0.0
        %1902 = vmatprep.subr.mxu0 0.0
        %1903 = vmatpush1.msra.mxu0 0.0
        %1904 = vmatprep.subr.mxu0 0.0
        %1905 = vmatpush1.msra.mxu0 0.0
        %1906 = vmatprep.subr.mxu0 0.0
        %1907 = vmatpush1.msra.mxu0 0.0
        %1908 = vmatprep.subr.mxu0 0.0
        %1909 = vmatpush1.msra.mxu0 0.0
        %1910 = vmatprep.subr.mxu0 0.0
        %1911 = vmatpush1.msra.mxu0 0.0
        %1912 = vmatprep.subr.mxu0 0.0
        %1913 = vmatpush1.msra.mxu0 0.0
        %1914 = vmatprep.subr.mxu0 0.0
        %1915 = vmatpush1.msra.mxu0 0.0
        %1916 = vmatprep.subr.mxu0 0.0
        %1917 = vmatpush1.msra.mxu0 0.0
        %1918 = vmatprep.subr.mxu0 0.0
        %1919 = vmatpush1.msra.mxu0 0.0
        %1920 = vmatprep.subr.mxu0 0.0
        %1921 = vmatpush1.msra.mxu0 0.0
        %1922 = vmatprep.subr.mxu0 0.0
        %1923 = vmatpush1.msra.mxu0 0.0
        %1924 = vmatprep.subr.mxu0 0.0
        %1925 = vmatpush1.msra.mxu0 0.0
        %1926 = vmatprep.subr.mxu0 0.0
        %1927 = vmatpush1.msra.mxu0 0.0
        %1928 = vmatprep.subr.mxu0 0.0
        %1929 = vmatpush1.msra.mxu0 0.0
        %1930 = vmatprep.mubr.f32.mxu0 0.0
        %v1931 = vand.u32 %v1499, 4294901760
        %1932 = vmatmul.mubr.f32.gmra.mrb[0].mxu0 %v1931
        %v1933 = vpop.f32.mrb[0].mxu0
        %v1934 = vadd.f32 %v1846, %v1933
        %v1935 = vpop.f32.mrb[0].mxu0
        %1936 = vmatprep.mubr.f32.mxu0 0.0
        %v1937 = vand.u32 %v1502, 4294901760
        %1938 = vmatmul.mubr.f32.gmra.mrb[0].mxu0 %v1937
        %v1939 = vpop.f32.mrb[0].mxu0
        %v1940 = vadd.f32 %v1854, %v1939
        %v1941 = vpop.f32.mrb[0].mxu0
        %1942 = vdwg.mxu0
        %1943 = vmatprep.subr.mxu0 0.0
        %v1944 = vand.u32 %v1480, 4294901760
        %1945 = vmatpush1.msra.mxu0 %v1944
        %1946 = vmatprep.subr.mxu0 0.0
        %v1947 = vand.u32 %v1481, 4294901760
        %1948 = vmatpush1.msra.mxu0 %v1947
        %1949 = vmatprep.subr.mxu0 0.0
        %v1950 = vand.u32 %v1506, 4294901760
        %1951 = vmatpush1.msra.mxu0 %v1950
        %1952 = vmatprep.subr.mxu0 0.0
        %1953 = vmatpush1.msra.mxu0 0.0
        %1954 = vmatprep.subr.mxu0 0.0
        %1955 = vmatpush1.msra.mxu0 0.0
        %1956 = vmatprep.subr.mxu0 0.0
        %1957 = vmatpush1.msra.mxu0 0.0
        %1958 = vmatprep.subr.mxu0 0.0
        %1959 = vmatpush1.msra.mxu0 0.0
        %1960 = vmatprep.subr.mxu0 0.0
        %1961 = vmatpush1.msra.mxu0 0.0
        %1962 = vmatprep.subr.mxu0 0.0
        %1963 = vmatpush1.msra.mxu0 0.0
        %1964 = vmatprep.subr.mxu0 0.0
        %1965 = vmatpush1.msra.mxu0 0.0
        %1966 = vmatprep.subr.mxu0 0.0
        %1967 = vmatpush1.msra.mxu0 0.0
        %1968 = vmatprep.subr.mxu0 0.0
        %1969 = vmatpush1.msra.mxu0 0.0
        %1970 = vmatprep.subr.mxu0 0.0
        %1971 = vmatpush1.msra.mxu0 0.0
        %1972 = vmatprep.subr.mxu0 0.0
        %1973 = vmatpush1.msra.mxu0 0.0
        %1974 = vmatprep.subr.mxu0 0.0
        %1975 = vmatpush1.msra.mxu0 0.0
        %1976 = vmatprep.subr.mxu0 0.0
        %1977 = vmatpush1.msra.mxu0 0.0
        %1978 = vmatprep.subr.mxu0 0.0
        %1979 = vmatpush1.msra.mxu0 0.0
        %1980 = vmatprep.subr.mxu0 0.0
        %1981 = vmatpush1.msra.mxu0 0.0
        %1982 = vmatprep.subr.mxu0 0.0
        %1983 = vmatpush1.msra.mxu0 0.0
        %1984 = vmatprep.subr.mxu0 0.0
        %1985 = vmatpush1.msra.mxu0 0.0
        %1986 = vmatprep.subr.mxu0 0.0
        %1987 = vmatpush1.msra.mxu0 0.0
        %1988 = vmatprep.subr.mxu0 0.0
        %1989 = vmatpush1.msra.mxu0 0.0
        %1990 = vmatprep.subr.mxu0 0.0
        %1991 = vmatpush1.msra.mxu0 0.0
        %1992 = vmatprep.subr.mxu0 0.0
        %1993 = vmatpush1.msra.mxu0 0.0
        %1994 = vmatprep.subr.mxu0 0.0
        %1995 = vmatpush1.msra.mxu0 0.0
        %1996 = vmatprep.subr.mxu0 0.0
        %1997 = vmatpush1.msra.mxu0 0.0
        %1998 = vmatprep.subr.mxu0 0.0
        %1999 = vmatpush1.msra.mxu0 0.0
        %2000 = vmatprep.subr.mxu0 0.0
        %2001 = vmatpush1.msra.mxu0 0.0
        %2002 = vmatprep.subr.mxu0 0.0
        %2003 = vmatpush1.msra.mxu0 0.0
        %2004 = vmatprep.subr.mxu0 0.0
        %2005 = vmatpush1.msra.mxu0 0.0
        %2006 = vmatprep.subr.mxu0 0.0
        %2007 = vmatpush1.msra.mxu0 0.0
        %2008 = vmatprep.subr.mxu0 0.0
        %2009 = vmatpush1.msra.mxu0 0.0
        %2010 = vmatprep.mubr.f32.mxu0 0.0
        %v2011 = vand.u32 %v1499, 4294901760
        %2012 = vmatmul.mubr.f32.gmra.mrb[0].mxu0 %v2011
        %v2013 = vpop.f32.mrb[0].mxu0
        %v2014 = vadd.f32 %v1934, %v2013
        %v2015 = vpop.f32.mrb[0].mxu0
        %2016 = vmatprep.mubr.f32.mxu0 0.0
        %v2017 = vand.u32 %v1502, 4294901760
        %2018 = vmatmul.mubr.f32.gmra.mrb[0].mxu0 %v2017
        %v2019 = vpop.f32.mrb[0].mxu0
        %v2020 = vadd.f32 %v1940, %v2019
        %v2021 = vpop.f32.mrb[0].mxu0
        %2022 = vdwg.mxu0
        %v2023 = vmax.f32 %v2014, 0.0
        %v2024 = vmax.f32 %v2020, 0.0
        %v2025 = vld [vmem:[%s7] sm:$0xff]
        %v2026 = vld [vmem:[%s7 + $0x8] sm:$0x1]
        %v2027 = vld [vmem:[%s8] sm:$0xff]
        %v2028 = vld [vmem:[%s8 + $0x8] sm:$0x1]
        %2030 = vset.pattern.permute.xlu0 0
        %2031 = vperm.xlu0 %2030, %v2027
        %v2032 = vpop.permute.xlu0 %2031
        %2035 = vset.pattern.permute.xlu0 0
        %2036 = vperm.xlu0 %2035, %v2028
        %v2037 = vpop.permute.xlu0 %2036
        %v2040 = vsel %vm921, %v2025, 0
        %v2043 = vsel %vm921, %v2026, 0
        %v2046 = vsel %vm931, %v2024, 0
        %2048 = vmatprep.subr.mxu0 0.0
        %v2049 = vand.u32 %v2023, 4294901760
        %2050 = vmatpush1.msra.mxu0 %v2049
        %2051 = vmatprep.subr.mxu0 0.0
        %v2052 = vand.u32 %v2046, 4294901760
        %2053 = vmatpush1.msra.mxu0 %v2052
        %2054 = vmatprep.subr.mxu0 0.0
        %2055 = vmatpush1.msra.mxu0 0.0
        %2056 = vmatprep.subr.mxu0 0.0
        %2057 = vmatpush1.msra.mxu0 0.0
        %2058 = vmatprep.subr.mxu0 0.0
        %2059 = vmatpush1.msra.mxu0 0.0
        %2060 = vmatprep.subr.mxu0 0.0
        %2061 = vmatpush1.msra.mxu0 0.0
        %2062 = vmatprep.subr.mxu0 0.0
        %2063 = vmatpush1.msra.mxu0 0.0
        %2064 = vmatprep.subr.mxu0 0.0
        %2065 = vmatpush1.msra.mxu0 0.0
        %2066 = vmatprep.subr.mxu0 0.0
        %2067 = vmatpush1.msra.mxu0 0.0
        %2068 = vmatprep.subr.mxu0 0.0
        %2069 = vmatpush1.msra.mxu0 0.0
        %2070 = vmatprep.subr.mxu0 0.0
        %2071 = vmatpush1.msra.mxu0 0.0
        %2072 = vmatprep.subr.mxu0 0.0
        %2073 = vmatpush1.msra.mxu0 0.0
        %2074 = vmatprep.subr.mxu0 0.0
        %2075 = vmatpush1.msra.mxu0 0.0
        %2076 = vmatprep.subr.mxu0 0.0
        %2077 = vmatpush1.msra.mxu0 0.0
        %2078 = vmatprep.subr.mxu0 0.0
        %2079 = vmatpush1.msra.mxu0 0.0
        %2080 = vmatprep.subr.mxu0 0.0
        %2081 = vmatpush1.msra.mxu0 0.0
        %2082 = vmatprep.subr.mxu0 0.0
        %2083 = vmatpush1.msra.mxu0 0.0
        %2084 = vmatprep.subr.mxu0 0.0
        %2085 = vmatpush1.msra.mxu0 0.0
        %2086 = vmatprep.subr.mxu0 0.0
        %2087 = vmatpush1.msra.mxu0 0.0
        %2088 = vmatprep.subr.mxu0 0.0
        %2089 = vmatpush1.msra.mxu0 0.0
        %2090 = vmatprep.subr.mxu0 0.0
        %2091 = vmatpush1.msra.mxu0 0.0
        %2092 = vmatprep.subr.mxu0 0.0
        %2093 = vmatpush1.msra.mxu0 0.0
        %2094 = vmatprep.subr.mxu0 0.0
        %2095 = vmatpush1.msra.mxu0 0.0
        %2096 = vmatprep.subr.mxu0 0.0
        %2097 = vmatpush1.msra.mxu0 0.0
        %2098 = vmatprep.subr.mxu0 0.0
        %2099 = vmatpush1.msra.mxu0 0.0
        %2100 = vmatprep.subr.mxu0 0.0
        %2101 = vmatpush1.msra.mxu0 0.0
        %2102 = vmatprep.subr.mxu0 0.0
        %2103 = vmatpush1.msra.mxu0 0.0
        %2104 = vmatprep.subr.mxu0 0.0
        %2105 = vmatpush1.msra.mxu0 0.0
        %2106 = vmatprep.subr.mxu0 0.0
        %2107 = vmatpush1.msra.mxu0 0.0
        %2108 = vmatprep.subr.mxu0 0.0
        %2109 = vmatpush1.msra.mxu0 0.0
        %2110 = vmatprep.subr.mxu0 0.0
        %2111 = vmatpush1.msra.mxu0 0.0
        %2112 = vmatprep.subr.mxu0 0.0
        %2113 = vmatpush1.msra.mxu0 0.0
        %2114 = vmatprep.mubr.f32.mxu0 0.0
        %v2115 = vand.u32 %v2040, 4294901760
        %v2116 = vsub.f32 %v2040, %v2115
        %v2117 = vand.u32 %v2116, 4294901760
        %v2118 = vsub.f32 %v2116, %v2117
        %v2119 = vand.u32 %v2118, 4294901760
        %2120 = vmatmul.mubr.f32.gmra.mrb[0].mxu0 %v2119
        %v2121 = vpop.f32.mrb[0].mxu0
        %v2122 = vadd.f32 %v2032, %v2121
        %v2123 = vpop.f32.mrb[0].mxu0
        %2124 = vmatprep.mubr.f32.mxu0 0.0
        %v2125 = vand.u32 %v2043, 4294901760
        %v2126 = vsub.f32 %v2043, %v2125
        %v2127 = vand.u32 %v2126, 4294901760
        %v2128 = vsub.f32 %v2126, %v2127
        %v2129 = vand.u32 %v2128, 4294901760
        %2130 = vmatmul.mubr.f32.gmra.mrb[0].mxu0 %v2129
        %v2131 = vpop.f32.mrb[0].mxu0
        %v2132 = vadd.f32 %v2037, %v2131
        %v2133 = vpop.f32.mrb[0].mxu0
        %2134 = vdwg.mxu0
        %2135 = vmatprep.subr.mxu0 0.0
        %v2136 = vand.u32 %v2023, 4294901760
        %v2137 = vsub.f32 %v2023, %v2136
        %v2138 = vand.u32 %v2137, 4294901760
        %v2139 = vsub.f32 %v2137, %v2138
        %v2140 = vand.u32 %v2139, 4294901760
        %2141 = vmatpush1.msra.mxu0 %v2140
        %2142 = vmatprep.subr.mxu0 0.0
        %v2143 = vand.u32 %v2046, 4294901760
        %v2144 = vsub.f32 %v2046, %v2143
        %v2145 = vand.u32 %v2144, 4294901760
        %v2146 = vsub.f32 %v2144, %v2145
        %v2147 = vand.u32 %v2146, 4294901760
        %2148 = vmatpush1.msra.mxu0 %v2147
        %2149 = vmatprep.subr.mxu0 0.0
        %2150 = vmatpush1.msra.mxu0 0.0
        %2151 = vmatprep.subr.mxu0 0.0
        %2152 = vmatpush1.msra.mxu0 0.0
        %2153 = vmatprep.subr.mxu0 0.0
        %2154 = vmatpush1.msra.mxu0 0.0
        %2155 = vmatprep.subr.mxu0 0.0
        %2156 = vmatpush1.msra.mxu0 0.0
        %2157 = vmatprep.subr.mxu0 0.0
        %2158 = vmatpush1.msra.mxu0 0.0
        %2159 = vmatprep.subr.mxu0 0.0
        %2160 = vmatpush1.msra.mxu0 0.0
        %2161 = vmatprep.subr.mxu0 0.0
        %2162 = vmatpush1.msra.mxu0 0.0
        %2163 = vmatprep.subr.mxu0 0.0
        %2164 = vmatpush1.msra.mxu0 0.0
        %2165 = vmatprep.subr.mxu0 0.0
        %2166 = vmatpush1.msra.mxu0 0.0
        %2167 = vmatprep.subr.mxu0 0.0
        %2168 = vmatpush1.msra.mxu0 0.0
        %2169 = vmatprep.subr.mxu0 0.0
        %2170 = vmatpush1.msra.mxu0 0.0
        %2171 = vmatprep.subr.mxu0 0.0
        %2172 = vmatpush1.msra.mxu0 0.0
        %2173 = vmatprep.subr.mxu0 0.0
        %2174 = vmatpush1.msra.mxu0 0.0
        %2175 = vmatprep.subr.mxu0 0.0
        %2176 = vmatpush1.msra.mxu0 0.0
        %2177 = vmatprep.subr.mxu0 0.0
        %2178 = vmatpush1.msra.mxu0 0.0
        %2179 = vmatprep.subr.mxu0 0.0
        %2180 = vmatpush1.msra.mxu0 0.0
        %2181 = vmatprep.subr.mxu0 0.0
        %2182 = vmatpush1.msra.mxu0 0.0
        %2183 = vmatprep.subr.mxu0 0.0
        %2184 = vmatpush1.msra.mxu0 0.0
        %2185 = vmatprep.subr.mxu0 0.0
        %2186 = vmatpush1.msra.mxu0 0.0
        %2187 = vmatprep.subr.mxu0 0.0
        %2188 = vmatpush1.msra.mxu0 0.0
        %2189 = vmatprep.subr.mxu0 0.0
        %2190 = vmatpush1.msra.mxu0 0.0
        %2191 = vmatprep.subr.mxu0 0.0
        %2192 = vmatpush1.msra.mxu0 0.0
        %2193 = vmatprep.subr.mxu0 0.0
        %2194 = vmatpush1.msra.mxu0 0.0
        %2195 = vmatprep.subr.mxu0 0.0
        %2196 = vmatpush1.msra.mxu0 0.0
        %2197 = vmatprep.subr.mxu0 0.0
        %2198 = vmatpush1.msra.mxu0 0.0
        %2199 = vmatprep.subr.mxu0 0.0
        %2200 = vmatpush1.msra.mxu0 0.0
        %2201 = vmatprep.subr.mxu0 0.0
        %2202 = vmatpush1.msra.mxu0 0.0
        %2203 = vmatprep.subr.mxu0 0.0
        %2204 = vmatpush1.msra.mxu0 0.0
        %2205 = vmatprep.subr.mxu0 0.0
        %2206 = vmatpush1.msra.mxu0 0.0
        %2207 = vmatprep.subr.mxu0 0.0
        %2208 = vmatpush1.msra.mxu0 0.0
        %2209 = vmatprep.mubr.f32.mxu0 0.0
        %v2210 = vand.u32 %v2040, 4294901760
        %2211 = vmatmul.mubr.f32.gmra.mrb[0].mxu0 %v2210
        %v2212 = vpop.f32.mrb[0].mxu0
        %v2213 = vadd.f32 %v2122, %v2212
        %v2214 = vpop.f32.mrb[0].mxu0
        %2215 = vmatprep.mubr.f32.mxu0 0.0
        %v2216 = vand.u32 %v2043, 4294901760
        %2217 = vmatmul.mubr.f32.gmra.mrb[0].mxu0 %v2216
        %v2218 = vpop.f32.mrb[0].mxu0
        %v2219 = vadd.f32 %v2132, %v2218
        %v2220 = vpop.f32.mrb[0].mxu0
        %2221 = vdwg.mxu0
        %2222 = vmatprep.subr.mxu0 0.0
        %v2223 = vand.u32 %v2023, 4294901760
        %v2224 = vsub.f32 %v2023, %v2223
        %2225 = vmatpush1.msra.mxu0 %v2224
        %2226 = vmatprep.subr.mxu0 0.0
        %v2227 = vand.u32 %v2046, 4294901760
        %v2228 = vsub.f32 %v2046, %v2227
        %2229 = vmatpush1.msra.mxu0 %v2228
        %2230 = vmatprep.subr.mxu0 0.0
        %2231 = vmatpush1.msra.mxu0 0.0
        %2232 = vmatprep.subr.mxu0 0.0
        %2233 = vmatpush1.msra.mxu0 0.0
        %2234 = vmatprep.subr.mxu0 0.0
        %2235 = vmatpush1.msra.mxu0 0.0
        %2236 = vmatprep.subr.mxu0 0.0
        %2237 = vmatpush1.msra.mxu0 0.0
        %2238 = vmatprep.subr.mxu0 0.0
        %2239 = vmatpush1.msra.mxu0 0.0
        %2240 = vmatprep.subr.mxu0 0.0
        %2241 = vmatpush1.msra.mxu0 0.0
        %2242 = vmatprep.subr.mxu0 0.0
        %2243 = vmatpush1.msra.mxu0 0.0
        %2244 = vmatprep.subr.mxu0 0.0
        %2245 = vmatpush1.msra.mxu0 0.0
        %2246 = vmatprep.subr.mxu0 0.0
        %2247 = vmatpush1.msra.mxu0 0.0
        %2248 = vmatprep.subr.mxu0 0.0
        %2249 = vmatpush1.msra.mxu0 0.0
        %2250 = vmatprep.subr.mxu0 0.0
        %2251 = vmatpush1.msra.mxu0 0.0
        %2252 = vmatprep.subr.mxu0 0.0
        %2253 = vmatpush1.msra.mxu0 0.0
        %2254 = vmatprep.subr.mxu0 0.0
        %2255 = vmatpush1.msra.mxu0 0.0
        %2256 = vmatprep.subr.mxu0 0.0
        %2257 = vmatpush1.msra.mxu0 0.0
        %2258 = vmatprep.subr.mxu0 0.0
        %2259 = vmatpush1.msra.mxu0 0.0
        %2260 = vmatprep.subr.mxu0 0.0
        %2261 = vmatpush1.msra.mxu0 0.0
        %2262 = vmatprep.subr.mxu0 0.0
        %2263 = vmatpush1.msra.mxu0 0.0
        %2264 = vmatprep.subr.mxu0 0.0
        %2265 = vmatpush1.msra.mxu0 0.0
        %2266 = vmatprep.subr.mxu0 0.0
        %2267 = vmatpush1.msra.mxu0 0.0
        %2268 = vmatprep.subr.mxu0 0.0
        %2269 = vmatpush1.msra.mxu0 0.0
        %2270 = vmatprep.subr.mxu0 0.0
        %2271 = vmatpush1.msra.mxu0 0.0
        %2272 = vmatprep.subr.mxu0 0.0
        %2273 = vmatpush1.msra.mxu0 0.0
        %2274 = vmatprep.subr.mxu0 0.0
        %2275 = vmatpush1.msra.mxu0 0.0
        %2276 = vmatprep.subr.mxu0 0.0
        %2277 = vmatpush1.msra.mxu0 0.0
        %2278 = vmatprep.subr.mxu0 0.0
        %2279 = vmatpush1.msra.mxu0 0.0
        %2280 = vmatprep.subr.mxu0 0.0
        %2281 = vmatpush1.msra.mxu0 0.0
        %2282 = vmatprep.subr.mxu0 0.0
        %2283 = vmatpush1.msra.mxu0 0.0
        %2284 = vmatprep.subr.mxu0 0.0
        %2285 = vmatpush1.msra.mxu0 0.0
        %2286 = vmatprep.subr.mxu0 0.0
        %2287 = vmatpush1.msra.mxu0 0.0
        %2288 = vmatprep.subr.mxu0 0.0
        %2289 = vmatpush1.msra.mxu0 0.0
        %2290 = vmatprep.mubr.f32.mxu0 0.0
        %v2291 = vand.u32 %v2040, 4294901760
        %v2292 = vsub.f32 %v2040, %v2291
        %2293 = vmatmul.mubr.f32.gmra.mrb[0].mxu0 %v2292
        %v2294 = vpop.f32.mrb[0].mxu0
        %v2295 = vadd.f32 %v2213, %v2294
        %v2296 = vpop.f32.mrb[0].mxu0
        %2297 = vmatprep.mubr.f32.mxu0 0.0
        %v2298 = vand.u32 %v2043, 4294901760
        %v2299 = vsub.f32 %v2043, %v2298
        %2300 = vmatmul.mubr.f32.gmra.mrb[0].mxu0 %v2299
        %v2301 = vpop.f32.mrb[0].mxu0
        %v2302 = vadd.f32 %v2219, %v2301
        %v2303 = vpop.f32.mrb[0].mxu0
        %2304 = vdwg.mxu0
        %2305 = vmatprep.subr.mxu0 0.0
        %v2306 = vand.u32 %v2023, 4294901760
        %2307 = vmatpush1.msra.mxu0 %v2306
        %2308 = vmatprep.subr.mxu0 0.0
        %v2309 = vand.u32 %v2046, 4294901760
        %2310 = vmatpush1.msra.mxu0 %v2309
        %2311 = vmatprep.subr.mxu0 0.0
        %2312 = vmatpush1.msra.mxu0 0.0
        %2313 = vmatprep.subr.mxu0 0.0
        %2314 = vmatpush1.msra.mxu0 0.0
        %2315 = vmatprep.subr.mxu0 0.0
        %2316 = vmatpush1.msra.mxu0 0.0
        %2317 = vmatprep.subr.mxu0 0.0
        %2318 = vmatpush1.msra.mxu0 0.0
        %2319 = vmatprep.subr.mxu0 0.0
        %2320 = vmatpush1.msra.mxu0 0.0
        %2321 = vmatprep.subr.mxu0 0.0
        %2322 = vmatpush1.msra.mxu0 0.0
        %2323 = vmatprep.subr.mxu0 0.0
        %2324 = vmatpush1.msra.mxu0 0.0
        %2325 = vmatprep.subr.mxu0 0.0
        %2326 = vmatpush1.msra.mxu0 0.0
        %2327 = vmatprep.subr.mxu0 0.0
        %2328 = vmatpush1.msra.mxu0 0.0
        %2329 = vmatprep.subr.mxu0 0.0
        %2330 = vmatpush1.msra.mxu0 0.0
        %2331 = vmatprep.subr.mxu0 0.0
        %2332 = vmatpush1.msra.mxu0 0.0
        %2333 = vmatprep.subr.mxu0 0.0
        %2334 = vmatpush1.msra.mxu0 0.0
        %2335 = vmatprep.subr.mxu0 0.0
        %2336 = vmatpush1.msra.mxu0 0.0
        %2337 = vmatprep.subr.mxu0 0.0
        %2338 = vmatpush1.msra.mxu0 0.0
        %2339 = vmatprep.subr.mxu0 0.0
        %2340 = vmatpush1.msra.mxu0 0.0
        %2341 = vmatprep.subr.mxu0 0.0
        %2342 = vmatpush1.msra.mxu0 0.0
        %2343 = vmatprep.subr.mxu0 0.0
        %2344 = vmatpush1.msra.mxu0 0.0
        %2345 = vmatprep.subr.mxu0 0.0
        %2346 = vmatpush1.msra.mxu0 0.0
        %2347 = vmatprep.subr.mxu0 0.0
        %2348 = vmatpush1.msra.mxu0 0.0
        %2349 = vmatprep.subr.mxu0 0.0
        %2350 = vmatpush1.msra.mxu0 0.0
        %2351 = vmatprep.subr.mxu0 0.0
        %2352 = vmatpush1.msra.mxu0 0.0
        %2353 = vmatprep.subr.mxu0 0.0
        %2354 = vmatpush1.msra.mxu0 0.0
        %2355 = vmatprep.subr.mxu0 0.0
        %2356 = vmatpush1.msra.mxu0 0.0
        %2357 = vmatprep.subr.mxu0 0.0
        %2358 = vmatpush1.msra.mxu0 0.0
        %2359 = vmatprep.subr.mxu0 0.0
        %2360 = vmatpush1.msra.mxu0 0.0
        %2361 = vmatprep.subr.mxu0 0.0
        %2362 = vmatpush1.msra.mxu0 0.0
        %2363 = vmatprep.subr.mxu0 0.0
        %2364 = vmatpush1.msra.mxu0 0.0
        %2365 = vmatprep.subr.mxu0 0.0
        %2366 = vmatpush1.msra.mxu0 0.0
        %2367 = vmatprep.subr.mxu0 0.0
        %2368 = vmatpush1.msra.mxu0 0.0
        %2369 = vmatprep.subr.mxu0 0.0
        %2370 = vmatpush1.msra.mxu0 0.0
        %2371 = vmatprep.mubr.f32.mxu0 0.0
        %v2372 = vand.u32 %v2040, 4294901760
        %v2373 = vsub.f32 %v2040, %v2372
        %v2374 = vand.u32 %v2373, 4294901760
        %2375 = vmatmul.mubr.f32.gmra.mrb[0].mxu0 %v2374
        %v2376 = vpop.f32.mrb[0].mxu0
        %v2377 = vadd.f32 %v2295, %v2376
        %v2378 = vpop.f32.mrb[0].mxu0
        %2379 = vmatprep.mubr.f32.mxu0 0.0
        %v2380 = vand.u32 %v2043, 4294901760
        %v2381 = vsub.f32 %v2043, %v2380
        %v2382 = vand.u32 %v2381, 4294901760
        %2383 = vmatmul.mubr.f32.gmra.mrb[0].mxu0 %v2382
        %v2384 = vpop.f32.mrb[0].mxu0
        %v2385 = vadd.f32 %v2302, %v2384
        %v2386 = vpop.f32.mrb[0].mxu0
        %2387 = vdwg.mxu0
        %2388 = vmatprep.subr.mxu0 0.0
        %v2389 = vand.u32 %v2023, 4294901760
        %v2390 = vsub.f32 %v2023, %v2389
        %v2391 = vand.u32 %v2390, 4294901760
        %2392 = vmatpush1.msra.mxu0 %v2391
        %2393 = vmatprep.subr.mxu0 0.0
        %v2394 = vand.u32 %v2046, 4294901760
        %v2395 = vsub.f32 %v2046, %v2394
        %v2396 = vand.u32 %v2395, 4294901760
        %2397 = vmatpush1.msra.mxu0 %v2396
        %2398 = vmatprep.subr.mxu0 0.0
        %2399 = vmatpush1.msra.mxu0 0.0
        %2400 = vmatprep.subr.mxu0 0.0
        %2401 = vmatpush1.msra.mxu0 0.0
        %2402 = vmatprep.subr.mxu0 0.0
        %2403 = vmatpush1.msra.mxu0 0.0
        %2404 = vmatprep.subr.mxu0 0.0
        %2405 = vmatpush1.msra.mxu0 0.0
        %2406 = vmatprep.subr.mxu0 0.0
        %2407 = vmatpush1.msra.mxu0 0.0
        %2408 = vmatprep.subr.mxu0 0.0
        %2409 = vmatpush1.msra.mxu0 0.0
        %2410 = vmatprep.subr.mxu0 0.0
        %2411 = vmatpush1.msra.mxu0 0.0
        %2412 = vmatprep.subr.mxu0 0.0
        %2413 = vmatpush1.msra.mxu0 0.0
        %2414 = vmatprep.subr.mxu0 0.0
        %2415 = vmatpush1.msra.mxu0 0.0
        %2416 = vmatprep.subr.mxu0 0.0
        %2417 = vmatpush1.msra.mxu0 0.0
        %2418 = vmatprep.subr.mxu0 0.0
        %2419 = vmatpush1.msra.mxu0 0.0
        %2420 = vmatprep.subr.mxu0 0.0
        %2421 = vmatpush1.msra.mxu0 0.0
        %2422 = vmatprep.subr.mxu0 0.0
        %2423 = vmatpush1.msra.mxu0 0.0
        %2424 = vmatprep.subr.mxu0 0.0
        %2425 = vmatpush1.msra.mxu0 0.0
        %2426 = vmatprep.subr.mxu0 0.0
        %2427 = vmatpush1.msra.mxu0 0.0
        %2428 = vmatprep.subr.mxu0 0.0
        %2429 = vmatpush1.msra.mxu0 0.0
        %2430 = vmatprep.subr.mxu0 0.0
        %2431 = vmatpush1.msra.mxu0 0.0
        %2432 = vmatprep.subr.mxu0 0.0
        %2433 = vmatpush1.msra.mxu0 0.0
        %2434 = vmatprep.subr.mxu0 0.0
        %2435 = vmatpush1.msra.mxu0 0.0
        %2436 = vmatprep.subr.mxu0 0.0
        %2437 = vmatpush1.msra.mxu0 0.0
        %2438 = vmatprep.subr.mxu0 0.0
        %2439 = vmatpush1.msra.mxu0 0.0
        %2440 = vmatprep.subr.mxu0 0.0
        %2441 = vmatpush1.msra.mxu0 0.0
        %2442 = vmatprep.subr.mxu0 0.0
        %2443 = vmatpush1.msra.mxu0 0.0
        %2444 = vmatprep.subr.mxu0 0.0
        %2445 = vmatpush1.msra.mxu0 0.0
        %2446 = vmatprep.subr.mxu0 0.0
        %2447 = vmatpush1.msra.mxu0 0.0
        %2448 = vmatprep.subr.mxu0 0.0
        %2449 = vmatpush1.msra.mxu0 0.0
        %2450 = vmatprep.subr.mxu0 0.0
        %2451 = vmatpush1.msra.mxu0 0.0
        %2452 = vmatprep.subr.mxu0 0.0
        %2453 = vmatpush1.msra.mxu0 0.0
        %2454 = vmatprep.subr.mxu0 0.0
        %2455 = vmatpush1.msra.mxu0 0.0
        %2456 = vmatprep.subr.mxu0 0.0
        %2457 = vmatpush1.msra.mxu0 0.0
        %2458 = vmatprep.mubr.f32.mxu0 0.0
        %v2459 = vand.u32 %v2040, 4294901760
        %2460 = vmatmul.mubr.f32.gmra.mrb[0].mxu0 %v2459
        %v2461 = vpop.f32.mrb[0].mxu0
        %v2462 = vadd.f32 %v2377, %v2461
        %v2463 = vpop.f32.mrb[0].mxu0
        %2464 = vmatprep.mubr.f32.mxu0 0.0
        %v2465 = vand.u32 %v2043, 4294901760
        %2466 = vmatmul.mubr.f32.gmra.mrb[0].mxu0 %v2465
        %v2467 = vpop.f32.mrb[0].mxu0
        %v2468 = vadd.f32 %v2385, %v2467
        %v2469 = vpop.f32.mrb[0].mxu0
        %2470 = vdwg.mxu0
        %2471 = vmatprep.subr.mxu0 0.0
        %v2472 = vand.u32 %v2023, 4294901760
        %2473 = vmatpush1.msra.mxu0 %v2472
        %2474 = vmatprep.subr.mxu0 0.0
        %v2475 = vand.u32 %v2046, 4294901760
        %2476 = vmatpush1.msra.mxu0 %v2475
        %2477 = vmatprep.subr.mxu0 0.0
        %2478 = vmatpush1.msra.mxu0 0.0
        %2479 = vmatprep.subr.mxu0 0.0
        %2480 = vmatpush1.msra.mxu0 0.0
        %2481 = vmatprep.subr.mxu0 0.0
        %2482 = vmatpush1.msra.mxu0 0.0
        %2483 = vmatprep.subr.mxu0 0.0
        %2484 = vmatpush1.msra.mxu0 0.0
        %2485 = vmatprep.subr.mxu0 0.0
        %2486 = vmatpush1.msra.mxu0 0.0
        %2487 = vmatprep.subr.mxu0 0.0
        %2488 = vmatpush1.msra.mxu0 0.0
        %2489 = vmatprep.subr.mxu0 0.0
        %2490 = vmatpush1.msra.mxu0 0.0
        %2491 = vmatprep.subr.mxu0 0.0
        %2492 = vmatpush1.msra.mxu0 0.0
        %2493 = vmatprep.subr.mxu0 0.0
        %2494 = vmatpush1.msra.mxu0 0.0
        %2495 = vmatprep.subr.mxu0 0.0
        %2496 = vmatpush1.msra.mxu0 0.0
        %2497 = vmatprep.subr.mxu0 0.0
        %2498 = vmatpush1.msra.mxu0 0.0
        %2499 = vmatprep.subr.mxu0 0.0
        %2500 = vmatpush1.msra.mxu0 0.0
        %2501 = vmatprep.subr.mxu0 0.0
        %2502 = vmatpush1.msra.mxu0 0.0
        %2503 = vmatprep.subr.mxu0 0.0
        %2504 = vmatpush1.msra.mxu0 0.0
        %2505 = vmatprep.subr.mxu0 0.0
        %2506 = vmatpush1.msra.mxu0 0.0
        %2507 = vmatprep.subr.mxu0 0.0
        %2508 = vmatpush1.msra.mxu0 0.0
        %2509 = vmatprep.subr.mxu0 0.0
        %2510 = vmatpush1.msra.mxu0 0.0
        %2511 = vmatprep.subr.mxu0 0.0
        %2512 = vmatpush1.msra.mxu0 0.0
        %2513 = vmatprep.subr.mxu0 0.0
        %2514 = vmatpush1.msra.mxu0 0.0
        %2515 = vmatprep.subr.mxu0 0.0
        %2516 = vmatpush1.msra.mxu0 0.0
        %2517 = vmatprep.subr.mxu0 0.0
        %2518 = vmatpush1.msra.mxu0 0.0
        %2519 = vmatprep.subr.mxu0 0.0
        %2520 = vmatpush1.msra.mxu0 0.0
        %2521 = vmatprep.subr.mxu0 0.0
        %2522 = vmatpush1.msra.mxu0 0.0
        %2523 = vmatprep.subr.mxu0 0.0
        %2524 = vmatpush1.msra.mxu0 0.0
        %2525 = vmatprep.subr.mxu0 0.0
        %2526 = vmatpush1.msra.mxu0 0.0
        %2527 = vmatprep.subr.mxu0 0.0
        %2528 = vmatpush1.msra.mxu0 0.0
        %2529 = vmatprep.subr.mxu0 0.0
        %2530 = vmatpush1.msra.mxu0 0.0
        %2531 = vmatprep.subr.mxu0 0.0
        %2532 = vmatpush1.msra.mxu0 0.0
        %2533 = vmatprep.subr.mxu0 0.0
        %2534 = vmatpush1.msra.mxu0 0.0
        %2535 = vmatprep.subr.mxu0 0.0
        %2536 = vmatpush1.msra.mxu0 0.0
        %2537 = vmatprep.mubr.f32.mxu0 0.0
        %v2538 = vand.u32 %v2040, 4294901760
        %2539 = vmatmul.mubr.f32.gmra.mrb[0].mxu0 %v2538
        %v2540 = vpop.f32.mrb[0].mxu0
        %v2541 = vadd.f32 %v2462, %v2540
        %v2542 = vpop.f32.mrb[0].mxu0
        %2543 = vmatprep.mubr.f32.mxu0 0.0
        %v2544 = vand.u32 %v2043, 4294901760
        %2545 = vmatmul.mubr.f32.gmra.mrb[0].mxu0 %v2544
        %v2546 = vpop.f32.mrb[0].mxu0
        %v2547 = vadd.f32 %v2468, %v2546
        %v2548 = vpop.f32.mrb[0].mxu0
        %2549 = vdwg.mxu0
        %v2550 = vmax.f32 %v2541, 0.0
        %v2551 = vmax.f32 %v2547, 0.0
        %2552 = vst [vmem:[%s368] sm:$0xff] %v2550
        %2553 = vst [vmem:[%s368 + $0x8] sm:$0x1] %v2551
        %s2554 = sand.u32 %s225, 1
        %s2555 = scalar_lea.sflag [#allocation4], %s2554
        %s2556 = sand.u32 %s225, 1
        %s2557 = smul.addr %s2556, 16
        %s2558 = scalar_lea.vmem [#allocation3], %s2557
        // Predicated region
        $region95: #{net_forward.1} parent=89 // pred_check
          %p2559 = pneg %p235
        $region96: #{net_forward.1} parent=89 // pred_check_branch
          %2561 = sbr.rel (%p2559) target = $region98
        $region97: #{net_forward.1} parent=89 // pred_region
          %s2563 = ssub.s32 256, 256
          %2564 = vsyncadd %s2555, %s2563
          %s2565 = smul.addr %s23, 128
          %s2566 = scalar_lea.hbm %s9, %s2565
          %s2567 = sshll.u32 %s2558, 4
          %s2568 = int_to_ptr.vmem [resolvable:$true] %s2567
          %2573 = dma.vmem_to_hbm [thread:$0]  %s2568, 256, %s2566, %s2555, 128, 256, 8
        $region98: #{net_forward.1} parent=89 // pred_fallthru
          _
      $region90: #{net_forward.1} parent=5 // pred_fallthru
        _
      %p2574 = scmp.le.s32.totalorder 2, %s18
      // Predicated region
      $region99: #{net_forward.1} parent=5 // pred_check
        %p2575 = pneg %p2574
      $region100: #{net_forward.1} parent=5 // pred_check_branch
        %2577 = sbr.rel (%p2575) target = $region102
      $region101: #{net_forward.1} parent=5 // pred_region
        %s2578 = ssub.s32 %s18, 2
        // Predicated region
        $region103: #{net_forward.1} parent=101 // pred_check
          %p2579 = pneg %p241
        $region104: #{net_forward.1} parent=101 // pred_check_branch
          %2581 = sbr.rel (%p2579) target = $region106
        $region105: #{net_forward.1} parent=101 // pred_region
          %s2582 = sand.u32 %s226, 1
          %s2583 = scalar_lea.sflag [#allocation4], %s2582
          %s2584 = sand.u32 %s226, 1
          %s2585 = smul.addr %s2584, 16
          %s2586 = scalar_lea.vmem [#allocation3], %s2585
          %2587 = dma.done %s2583, 256
        $region106: #{net_forward.1} parent=101 // pred_fallthru
          _
      $region102: #{net_forward.1} parent=5 // pred_fallthru
        _
    $region6: #{net_forward.1} parent=1 // loop_footer
      %s22 = sadd.s32 1, %s18
    $region7: #{net_forward.1} parent=1 // loop_footer_branch
      %17 = sbr.rel target = $region3
    $region8: #{net_forward.1} parent=1 // loop_exit
      _
    %2588 = vsyncpa [#allocation4], 1
    %s2589 = scalar_lea.sflag [#allocation4], 1
    %2590 = vsyncpa %s2589, 1

</llo_original>
